<compile_context>
chip_gen: v6e
topology: v6e:2x2x1
jax: 0.10.0
libtpu: 0.0.40
codegen_flags: <defaults>
</compile_context>

<pallas_src>
import jax
import jax.numpy as jnp
import numpy as np
from jax import lax
from jax.experimental import pallas as pl
from jax.experimental.pallas import tpu as pltpu


# -----------------------------------------------------------------------------
# Pallas kernel: full multi-layer LSTM recurrence + final linear projection.
# The whole problem lives in VMEM; single grid point, recurrence unrolled
# inside the kernel.
# -----------------------------------------------------------------------------
def _make_lstm_kernel(num_layers, seq_len, hidden_size):
    H = hidden_size
    G = 4 * H

    def kernel(*refs):
        # inputs : seq, (w_ih_t, w_hh_t, b) * num_layers, w_lin_pad, b_lin_pad
        # outputs: pred_pad, h_n, c_n
        # scratch: xproj_sc (seq_len, 4H), act_sc (seq_len, H)
        idx = 0
        seq_ref = refs[idx]; idx += 1
        layer_refs = []
        for _ in range(num_layers):
            layer_refs.append((refs[idx], refs[idx + 1], refs[idx + 2]))
            idx += 3
        w_lin_ref = refs[idx]; idx += 1
        b_lin_ref = refs[idx]; idx += 1
        pred_ref, hn_ref, cn_ref, xproj_sc, act_sc = refs[idx:idx + 5]

        # Lane mask selecting the g-gate (tanh) lanes of the fused (1, 4H)
        # gate vector.  Hoisted: computed once, reused by every layer/step.
        lane = lax.broadcasted_iota(jnp.int32, (1, G), 1)
        g_mask = (lane >= 2 * H) & (lane < 3 * H)

        for layer in range(num_layers):
            w_ih_ref, w_hh_ref, b_ref = layer_refs[layer]

            # --- hoisted input projection (+ folded bias) for the whole seq ---
            x_all = seq_ref[...] if layer == 0 else act_sc[...]
            xproj_sc[...] = (
                jnp.dot(x_all, w_ih_ref[...],
                        preferred_element_type=jnp.float32)
                + b_ref[...]
            )                                              # (seq_len, 4H)

            # recurrent weight held as a value across the unrolled loop
            w_hh = w_hh_ref[...]                            # (H, 4H)

            def step(t, carry):
                h, c = carry                                # (1, H) each, vregs
                gates = (
                    jnp.dot(h, w_hh, preferred_element_type=jnp.float32)
                    + xproj_sc[pl.ds(t, 1), :]
                )                                           # (1, 4H)
                # full-vreg transcendentals, then pick tanh lanes for g-gate
                act = jnp.where(g_mask, jnp.tanh(gates), jax.nn.sigmoid(gates))
                i_g = act[:, 0 * H:1 * H]
                f_g = act[:, 1 * H:2 * H]
                g_g = act[:, 2 * H:3 * H]
                o_g = act[:, 3 * H:4 * H]
                c_new = f_g * c + i_g * g_g
                h_new = o_g * jnp.tanh(c_new)
                # layer output (consumed by next layer / final linear)
                act_sc[pl.ds(t, 1), :] = h_new
                return h_new, c_new

            h0 = jnp.zeros((1, H), jnp.float32)   # PyTorch default zero state
            c0 = jnp.zeros((1, H), jnp.float32)
            h_f, c_f = lax.fori_loop(0, seq_len, step, (h0, c0), unroll=True)

            hn_ref[pl.ds(layer, 1), :] = h_f
            cn_ref[pl.ds(layer, 1), :] = c_f

        # final linear layer on the last layer's full hidden-state sequence,
        # written as a lane-dense 128-wide padded slab.
        pred_ref[...] = (
            jnp.dot(act_sc[...], w_lin_ref[...],
                    preferred_element_type=jnp.float32)
            + b_lin_ref[...]
        )

    return kernel


# -----------------------------------------------------------------------------
# Wrapper
# -----------------------------------------------------------------------------
def lstm_model_forward(seq, layer_params, w_lin_t, b_lin, *,
                       hidden_size, out_size):
    """seq: (seq_len, input_size) f32.
    layer_params: list of (w_ih_t, w_hh_t, b) with
        w_ih_t : (in_features, 4*hidden)
        w_hh_t : (hidden, 4*hidden)
        b      : (1, 4*hidden)   == b_ih + b_hh
    w_lin_t: (hidden, out_size), b_lin: (1, out_size)
    Returns (pred, (h_n, c_n)).
    """
    seq_len = seq.shape[0]
    num_layers = len(layer_params)

    # Pad the linear projection to a lane-dense (multiple-of-128) output slab;
    # slice back to out_size outside the kernel.
    padded_out = max(128, ((out_size + 127) // 128) * 128)
    w_lin_pad = jnp.zeros((hidden_size, padded_out), jnp.float32)
    w_lin_pad = w_lin_pad.at[:, :out_size].set(w_lin_t)
    b_lin_pad = jnp.zeros((1, padded_out), jnp.float32)
    b_lin_pad = b_lin_pad.at[:, :out_size].set(b_lin)

    flat_params = []
    for p in layer_params:
        flat_params.extend(p)
    flat_params.extend([w_lin_pad, b_lin_pad])

    kernel = _make_lstm_kernel(num_layers, seq_len, hidden_size)

    n_in = 1 + len(flat_params)
    vmem_spec = pl.BlockSpec(memory_space=pltpu.MemorySpace.VMEM)

    out_shape = (
        jax.ShapeDtypeStruct((seq_len, padded_out), jnp.float32),
        jax.ShapeDtypeStruct((num_layers, hidden_size), jnp.float32),
        jax.ShapeDtypeStruct((num_layers, hidden_size), jnp.float32),
    )

    pred_pad, h_n, c_n = pl.pallas_call(
        kernel,
        out_shape=out_shape,
        in_specs=[vmem_spec] * n_in,
        out_specs=(vmem_spec, vmem_spec, vmem_spec),
        scratch_shapes=[
            pltpu.VMEM((seq_len, 4 * hidden_size), jnp.float32),  # xproj_sc
            pltpu.VMEM((seq_len, hidden_size), jnp.float32),      # act_sc
        ],
    )(seq, *flat_params)

    # TODO(synk): for batched multi-sequence use on v7x, add a leading
    # "parallel" grid axis over batch to occupy the second TensorCore.
    return pred_pad[:, :out_size], (h_n, c_n)


# -----------------------------------------------------------------------------
# Pure-JAX reference (mirrors torch.nn.LSTM + nn.Linear semantics)
# -----------------------------------------------------------------------------
def lstm_model_ref(seq, layer_params, w_lin_t, b_lin, hidden_size):
    H = hidden_size
    x = seq
    h_n, c_n = [], []
    for (w_ih_t, w_hh_t, b) in layer_params:
        h = jnp.zeros((1, H), jnp.float32)
        c = jnp.zeros((1, H), jnp.float32)
        outs = []
        for t in range(x.shape[0]):
            g = x[t:t + 1] @ w_ih_t + h @ w_hh_t + b
            i_g = jax.nn.sigmoid(g[:, 0 * H:1 * H])
            f_g = jax.nn.sigmoid(g[:, 1 * H:2 * H])
            g_g = jnp.tanh(g[:, 2 * H:3 * H])
            o_g = jax.nn.sigmoid(g[:, 3 * H:4 * H])
            c = f_g * c + i_g * g_g
            h = o_g * jnp.tanh(c)
            outs.append(h)
        x = jnp.concatenate(outs, axis=0)
        h_n.append(h)
        c_n.append(c)
    pred = x @ w_lin_t + b_lin
    return pred, (jnp.concatenate(h_n, 0), jnp.concatenate(c_n, 0))


if __name__ == "__main__":
    # Small shapes consistent with the module's forward (unbatched sequence).
    input_size, hidden_size, out_size, num_layers = 4, 32, 4, 2
    seq_len = 8

    key = jax.random.PRNGKey(0)
    keys = iter(jax.random.split(key, 3 + 6 * num_layers))

    seq = jax.random.normal(next(keys), (seq_len, input_size), jnp.float32)

    # Deterministic parameter init (shapes follow nn.LSTM / nn.Linear).
    scale = 1.0 / np.sqrt(hidden_size)
    layer_params = []
    for l in range(num_layers):
        in_feat = input_size if l == 0 else hidden_size
        w_ih = jax.random.uniform(next(keys), (4 * hidden_size, in_feat),
                                  jnp.float32, -scale, scale)
        w_hh = jax.random.uniform(next(keys), (4 * hidden_size, hidden_size),
                                  jnp.float32, -scale, scale)
        b_ih = jax.random.uniform(next(keys), (4 * hidden_size,),
                                  jnp.float32, -scale, scale)
        b_hh = jax.random.uniform(next(keys), (4 * hidden_size,),
                                  jnp.float32, -scale, scale)
        layer_params.append((w_ih.T, w_hh.T, (b_ih + b_hh)[None, :]))

    w_lin = jax.random.uniform(next(keys), (out_size, hidden_size),
                               jnp.float32, -scale, scale)
    b_lin = jax.random.uniform(next(keys), (out_size,),
                               jnp.float32, -scale, scale)
    w_lin_t = w_lin.T
    b_lin_row = b_lin[None, :]

    pred, (h_n, c_n) = lstm_model_forward(
        seq, layer_params, w_lin_t, b_lin_row,
        hidden_size=hidden_size, out_size=out_size)
    jax.block_until_ready((pred, h_n, c_n))

    pred_r, (h_r, c_r) = lstm_model_ref(
        seq, layer_params, w_lin_t, b_lin_row, hidden_size)
    np.testing.assert_allclose(np.asarray(pred), np.asarray(pred_r),
                               rtol=1e-3, atol=1e-3)
    np.testing.assert_allclose(np.asarray(h_n), np.asarray(h_r),
                               rtol=1e-3, atol=1e-3)
    np.testing.assert_allclose(np.asarray(c_n), np.asarray(c_r),
                               rtol=1e-3, atol=1e-3)

    print("KERNEL_OK")
</pallas_src>

<mosaic_0001>
module attributes {stable_mosaic.version = 11 : i64} {
  func.func @kernel(%arg0: memref<8x4xf32, #tpu.memory_space<vmem>>, %arg1: memref<4x128xf32, #tpu.memory_space<vmem>>, %arg2: memref<32x128xf32, #tpu.memory_space<vmem>>, %arg3: memref<1x128xf32, #tpu.memory_space<vmem>>, %arg4: memref<32x128xf32, #tpu.memory_space<vmem>>, %arg5: memref<32x128xf32, #tpu.memory_space<vmem>>, %arg6: memref<1x128xf32, #tpu.memory_space<vmem>>, %arg7: memref<32x128xf32, #tpu.memory_space<vmem>>, %arg8: memref<1x128xf32, #tpu.memory_space<vmem>>, %arg9: memref<8x128xf32, #tpu.memory_space<vmem>>, %arg10: memref<2x32xf32, #tpu.memory_space<vmem>>, %arg11: memref<2x32xf32, #tpu.memory_space<vmem>>, %arg12: memref<8x128xf32, #tpu.memory_space<vmem>>, %arg13: memref<8x32xf32, #tpu.memory_space<vmem>>) attributes {dimension_semantics = [], scalar_prefetch = 0 : i64, scratch_operands = 2 : i64, tpu.core_type = #tpu.core_type<tc>} {
    %0 = tpu.iota {dimensions = array<i32: 1>} : vector<1x128xi32>
    %c64_i32 = arith.constant 64 : i32
    %1 = vector.broadcast %c64_i32 : i32 to vector<1x128xi32>
    %2 = arith.cmpi sge, %0, %1 : vector<1x128xi32>
    %c96_i32 = arith.constant 96 : i32
    %3 = vector.broadcast %c96_i32 : i32 to vector<1x128xi32>
    %4 = arith.cmpi slt, %0, %3 : vector<1x128xi32>
    %5 = arith.andi %2, %4 : vector<1x128xi1>
    %c0 = arith.constant 0 : index
    %c0_0 = arith.constant 0 : index
    %6 = vector.load %arg0[%c0, %c0_0] : memref<8x4xf32, #tpu.memory_space<vmem>>, vector<8x4xf32>
    %c0_1 = arith.constant 0 : index
    %c0_2 = arith.constant 0 : index
    %7 = vector.load %arg1[%c0_1, %c0_2] : memref<4x128xf32, #tpu.memory_space<vmem>>, vector<4x128xf32>
    %cst = arith.constant dense<0.000000e+00> : vector<8x128xf32>
    %8 = tpu.matmul %6, %7, %cst {dimension_numbers = #tpu.dot_dimension_numbers<[1], [0], [0], [1], [0, 0, 1, 1], [], []>} : vector<8x4xf32>, vector<4x128xf32>, vector<8x128xf32> -> vector<8x128xf32>
    %c0_3 = arith.constant 0 : index
    %c0_4 = arith.constant 0 : index
    %9 = vector.load %arg3[%c0_3, %c0_4] : memref<1x128xf32, #tpu.memory_space<vmem>>, vector<1x128xf32>
    %10 = vector.broadcast %9 : vector<1x128xf32> to vector<8x128xf32>
    %11 = arith.addf %8, %10 : vector<8x128xf32>
    %c0_5 = arith.constant 0 : index
    %c0_6 = arith.constant 0 : index
    %12 = vector.load %arg12[%c0_5, %c0_6] : memref<8x128xf32, #tpu.memory_space<vmem>>, vector<8x128xf32>
    tpu.vector_store %arg12[%c0_5, %c0_6], %11 {strides = array<i32>} : memref<8x128xf32, #tpu.memory_space<vmem>>, vector<8x128xf32>,
    %c0_7 = arith.constant 0 : index
    %c0_8 = arith.constant 0 : index
    %13 = vector.load %arg2[%c0_7, %c0_8] : memref<32x128xf32, #tpu.memory_space<vmem>>, vector<32x128xf32>
    %cst_9 = arith.constant 0.000000e+00 : f32
    %14 = vector.broadcast %cst_9 : f32 to vector<1x32xf32>
    %cst_10 = arith.constant 0.000000e+00 : f32
    %15 = vector.broadcast %cst_10 : f32 to vector<1x32xf32>
    %c0_i32 = arith.constant 0 : i32
    %cst_11 = arith.constant dense<0.000000e+00> : vector<1x128xf32>
    %16 = tpu.matmul %14, %13, %cst_11 {dimension_numbers = #tpu.dot_dimension_numbers<[1], [0], [0], [1], [0, 0, 1, 1], [], []>} : vector<1x32xf32>, vector<32x128xf32>, vector<1x128xf32> -> vector<1x128xf32>
    %17 = arith.index_cast %c0_i32 : i32 to index
    %c0_12 = arith.constant 0 : index
    %18 = vector.load %arg12[%17, %c0_12] : memref<8x128xf32, #tpu.memory_space<vmem>>, vector<1x128xf32>
    %19 = arith.addf %16, %18 : vector<1x128xf32>
    %20 = math.tanh %19 : vector<1x128xf32>
    %21 = arith.negf %19 : vector<1x128xf32>
    %22 = math.exp %21 : vector<1x128xf32>
    %cst_13 = arith.constant 1.000000e+00 : f32
    %23 = vector.broadcast %cst_13 : f32 to vector<1x128xf32>
    %24 = arith.addf %23, %22 : vector<1x128xf32>
    %25 = arith.divf %23, %24 : vector<1x128xf32>
    %26 = arith.select %5, %20, %25 : vector<1x128xi1>, vector<1x128xf32>
    %27 = vector.extract_strided_slice %26 {offsets = [0, 0], sizes = [1, 32], strides = [1, 1]} : vector<1x128xf32> to vector<1x32xf32>
    %28 = vector.extract_strided_slice %26 {offsets = [0, 32], sizes = [1, 32], strides = [1, 1]} : vector<1x128xf32> to vector<1x32xf32>
    %29 = vector.extract_strided_slice %26 {offsets = [0, 64], sizes = [1, 32], strides = [1, 1]} : vector<1x128xf32> to vector<1x32xf32>
    %30 = vector.extract_strided_slice %26 {offsets = [0, 96], sizes = [1, 32], strides = [1, 1]} : vector<1x128xf32> to vector<1x32xf32>
    %31 = arith.mulf %28, %15 : vector<1x32xf32>
    %32 = arith.mulf %27, %29 : vector<1x32xf32>
    %33 = arith.addf %31, %32 : vector<1x32xf32>
    %34 = math.tanh %33 : vector<1x32xf32>
    %35 = arith.mulf %30, %34 : vector<1x32xf32>
    %36 = arith.index_cast %c0_i32 : i32 to index
    %c0_14 = arith.constant 0 : index
    %37 = vector.load %arg13[%36, %c0_14] : memref<8x32xf32, #tpu.memory_space<vmem>>, vector<1x32xf32>
    tpu.vector_store %arg13[%36, %c0_14], %35 {strides = array<i32>} : memref<8x32xf32, #tpu.memory_space<vmem>>, vector<1x32xf32>,
    %c1_i32 = arith.constant 1 : i32
    %cst_15 = arith.constant dense<0.000000e+00> : vector<1x128xf32>
    %38 = tpu.matmul %35, %13, %cst_15 {dimension_numbers = #tpu.dot_dimension_numbers<[1], [0], [0], [1], [0, 0, 1, 1], [], []>} : vector<1x32xf32>, vector<32x128xf32>, vector<1x128xf32> -> vector<1x128xf32>
    %39 = arith.index_cast %c1_i32 : i32 to index
    %c0_16 = arith.constant 0 : index
    %40 = vector.load %arg12[%39, %c0_16] : memref<8x128xf32, #tpu.memory_space<vmem>>, vector<1x128xf32>
    %41 = arith.addf %38, %40 : vector<1x128xf32>
    %42 = math.tanh %41 : vector<1x128xf32>
    %43 = arith.negf %41 : vector<1x128xf32>
    %44 = math.exp %43 : vector<1x128xf32>
    %cst_17 = arith.constant 1.000000e+00 : f32
    %45 = vector.broadcast %cst_17 : f32 to vector<1x128xf32>
    %46 = arith.addf %45, %44 : vector<1x128xf32>
    %47 = arith.divf %45, %46 : vector<1x128xf32>
    %48 = arith.select %5, %42, %47 : vector<1x128xi1>, vector<1x128xf32>
    %49 = vector.extract_strided_slice %48 {offsets = [0, 0], sizes = [1, 32], strides = [1, 1]} : vector<1x128xf32> to vector<1x32xf32>
    %50 = vector.extract_strided_slice %48 {offsets = [0, 32], sizes = [1, 32], strides = [1, 1]} : vector<1x128xf32> to vector<1x32xf32>
    %51 = vector.extract_strided_slice %48 {offsets = [0, 64], sizes = [1, 32], strides = [1, 1]} : vector<1x128xf32> to vector<1x32xf32>
    %52 = vector.extract_strided_slice %48 {offsets = [0, 96], sizes = [1, 32], strides = [1, 1]} : vector<1x128xf32> to vector<1x32xf32>
    %53 = arith.mulf %50, %33 : vector<1x32xf32>
    %54 = arith.mulf %49, %51 : vector<1x32xf32>
    %55 = arith.addf %53, %54 : vector<1x32xf32>
    %56 = math.tanh %55 : vector<1x32xf32>
    %57 = arith.mulf %52, %56 : vector<1x32xf32>
    %58 = arith.index_cast %c1_i32 : i32 to index
    %c0_18 = arith.constant 0 : index
    %59 = vector.load %arg13[%58, %c0_18] : memref<8x32xf32, #tpu.memory_space<vmem>>, vector<1x32xf32>
    tpu.vector_store %arg13[%58, %c0_18], %57 {strides = array<i32>} : memref<8x32xf32, #tpu.memory_space<vmem>>, vector<1x32xf32>,
    %c2_i32 = arith.constant 2 : i32
    %cst_19 = arith.constant dense<0.000000e+00> : vector<1x128xf32>
    %60 = tpu.matmul %57, %13, %cst_19 {dimension_numbers = #tpu.dot_dimension_numbers<[1], [0], [0], [1], [0, 0, 1, 1], [], []>} : vector<1x32xf32>, vector<32x128xf32>, vector<1x128xf32> -> vector<1x128xf32>
    %61 = arith.index_cast %c2_i32 : i32 to index
    %c0_20 = arith.constant 0 : index
    %62 = vector.load %arg12[%61, %c0_20] : memref<8x128xf32, #tpu.memory_space<vmem>>, vector<1x128xf32>
    %63 = arith.addf %60, %62 : vector<1x128xf32>
    %64 = math.tanh %63 : vector<1x128xf32>
    %65 = arith.negf %63 : vector<1x128xf32>
    %66 = math.exp %65 : vector<1x128xf32>
    %cst_21 = arith.constant 1.000000e+00 : f32
    %67 = vector.broadcast %cst_21 : f32 to vector<1x128xf32>
    %68 = arith.addf %67, %66 : vector<1x128xf32>
    %69 = arith.divf %67, %68 : vector<1x128xf32>
    %70 = arith.select %5, %64, %69 : vector<1x128xi1>, vector<1x128xf32>
    %71 = vector.extract_strided_slice %70 {offsets = [0, 0], sizes = [1, 32], strides = [1, 1]} : vector<1x128xf32> to vector<1x32xf32>
    %72 = vector.extract_strided_slice %70 {offsets = [0, 32], sizes = [1, 32], strides = [1, 1]} : vector<1x128xf32> to vector<1x32xf32>
    %73 = vector.extract_strided_slice %70 {offsets = [0, 64], sizes = [1, 32], strides = [1, 1]} : vector<1x128xf32> to vector<1x32xf32>
    %74 = vector.extract_strided_slice %70 {offsets = [0, 96], sizes = [1, 32], strides = [1, 1]} : vector<1x128xf32> to vector<1x32xf32>
    %75 = arith.mulf %72, %55 : vector<1x32xf32>
    %76 = arith.mulf %71, %73 : vector<1x32xf32>
    %77 = arith.addf %75, %76 : vector<1x32xf32>
    %78 = math.tanh %77 : vector<1x32xf32>
    %79 = arith.mulf %74, %78 : vector<1x32xf32>
    %80 = arith.index_cast %c2_i32 : i32 to index
    %c0_22 = arith.constant 0 : index
    %81 = vector.load %arg13[%80, %c0_22] : memref<8x32xf32, #tpu.memory_space<vmem>>, vector<1x32xf32>
    tpu.vector_store %arg13[%80, %c0_22], %79 {strides = array<i32>} : memref<8x32xf32, #tpu.memory_space<vmem>>, vector<1x32xf32>,
    %c3_i32 = arith.constant 3 : i32
    %cst_23 = arith.constant dense<0.000000e+00> : vector<1x128xf32>
    %82 = tpu.matmul %79, %13, %cst_23 {dimension_numbers = #tpu.dot_dimension_numbers<[1], [0], [0], [1], [0, 0, 1, 1], [], []>} : vector<1x32xf32>, vector<32x128xf32>, vector<1x128xf32> -> vector<1x128xf32>
    %83 = arith.index_cast %c3_i32 : i32 to index
    %c0_24 = arith.constant 0 : index
    %84 = vector.load %arg12[%83, %c0_24] : memref<8x128xf32, #tpu.memory_space<vmem>>, vector<1x128xf32>
    %85 = arith.addf %82, %84 : vector<1x128xf32>
    %86 = math.tanh %85 : vector<1x128xf32>
    %87 = arith.negf %85 : vector<1x128xf32>
    %88 = math.exp %87 : vector<1x128xf32>
    %cst_25 = arith.constant 1.000000e+00 : f32
    %89 = vector.broadcast %cst_25 : f32 to vector<1x128xf32>
    %90 = arith.addf %89, %88 : vector<1x128xf32>
    %91 = arith.divf %89, %90 : vector<1x128xf32>
    %92 = arith.select %5, %86, %91 : vector<1x128xi1>, vector<1x128xf32>
    %93 = vector.extract_strided_slice %92 {offsets = [0, 0], sizes = [1, 32], strides = [1, 1]} : vector<1x128xf32> to vector<1x32xf32>
    %94 = vector.extract_strided_slice %92 {offsets = [0, 32], sizes = [1, 32], strides = [1, 1]} : vector<1x128xf32> to vector<1x32xf32>
    %95 = vector.extract_strided_slice %92 {offsets = [0, 64], sizes = [1, 32], strides = [1, 1]} : vector<1x128xf32> to vector<1x32xf32>
    %96 = vector.extract_strided_slice %92 {offsets = [0, 96], sizes = [1, 32], strides = [1, 1]} : vector<1x128xf32> to vector<1x32xf32>
    %97 = arith.mulf %94, %77 : vector<1x32xf32>
    %98 = arith.mulf %93, %95 : vector<1x32xf32>
    %99 = arith.addf %97, %98 : vector<1x32xf32>
    %100 = math.tanh %99 : vector<1x32xf32>
    %101 = arith.mulf %96, %100 : vector<1x32xf32>
    %102 = arith.index_cast %c3_i32 : i32 to index
    %c0_26 = arith.constant 0 : index
    %103 = vector.load %arg13[%102, %c0_26] : memref<8x32xf32, #tpu.memory_space<vmem>>, vector<1x32xf32>
    tpu.vector_store %arg13[%102, %c0_26], %101 {strides = array<i32>} : memref<8x32xf32, #tpu.memory_space<vmem>>, vector<1x32xf32>,
    %c4_i32 = arith.constant 4 : i32
    %cst_27 = arith.constant dense<0.000000e+00> : vector<1x128xf32>
    %104 = tpu.matmul %101, %13, %cst_27 {dimension_numbers = #tpu.dot_dimension_numbers<[1], [0], [0], [1], [0, 0, 1, 1], [], []>} : vector<1x32xf32>, vector<32x128xf32>, vector<1x128xf32> -> vector<1x128xf32>
    %105 = arith.index_cast %c4_i32 : i32 to index
    %c0_28 = arith.constant 0 : index
    %106 = vector.load %arg12[%105, %c0_28] : memref<8x128xf32, #tpu.memory_space<vmem>>, vector<1x128xf32>
    %107 = arith.addf %104, %106 : vector<1x128xf32>
    %108 = math.tanh %107 : vector<1x128xf32>
    %109 = arith.negf %107 : vector<1x128xf32>
    %110 = math.exp %109 : vector<1x128xf32>
    %cst_29 = arith.constant 1.000000e+00 : f32
    %111 = vector.broadcast %cst_29 : f32 to vector<1x128xf32>
    %112 = arith.addf %111, %110 : vector<1x128xf32>
    %113 = arith.divf %111, %112 : vector<1x128xf32>
    %114 = arith.select %5, %108, %113 : vector<1x128xi1>, vector<1x128xf32>
    %115 = vector.extract_strided_slice %114 {offsets = [0, 0], sizes = [1, 32], strides = [1, 1]} : vector<1x128xf32> to vector<1x32xf32>
    %116 = vector.extract_strided_slice %114 {offsets = [0, 32], sizes = [1, 32], strides = [1, 1]} : vector<1x128xf32> to vector<1x32xf32>
    %117 = vector.extract_strided_slice %114 {offsets = [0, 64], sizes = [1, 32], strides = [1, 1]} : vector<1x128xf32> to vector<1x32xf32>
    %118 = vector.extract_strided_slice %114 {offsets = [0, 96], sizes = [1, 32], strides = [1, 1]} : vector<1x128xf32> to vector<1x32xf32>
    %119 = arith.mulf %116, %99 : vector<1x32xf32>
    %120 = arith.mulf %115, %117 : vector<1x32xf32>
    %121 = arith.addf %119, %120 : vector<1x32xf32>
    %122 = math.tanh %121 : vector<1x32xf32>
    %123 = arith.mulf %118, %122 : vector<1x32xf32>
    %124 = arith.index_cast %c4_i32 : i32 to index
    %c0_30 = arith.constant 0 : index
    %125 = vector.load %arg13[%124, %c0_30] : memref<8x32xf32, #tpu.memory_space<vmem>>, vector<1x32xf32>
    tpu.vector_store %arg13[%124, %c0_30], %123 {strides = array<i32>} : memref<8x32xf32, #tpu.memory_space<vmem>>, vector<1x32xf32>,
    %c5_i32 = arith.constant 5 : i32
    %cst_31 = arith.constant dense<0.000000e+00> : vector<1x128xf32>
    %126 = tpu.matmul %123, %13, %cst_31 {dimension_numbers = #tpu.dot_dimension_numbers<[1], [0], [0], [1], [0, 0, 1, 1], [], []>} : vector<1x32xf32>, vector<32x128xf32>, vector<1x128xf32> -> vector<1x128xf32>
    %127 = arith.index_cast %c5_i32 : i32 to index
    %c0_32 = arith.constant 0 : index
    %128 = vector.load %arg12[%127, %c0_32] : memref<8x128xf32, #tpu.memory_space<vmem>>, vector<1x128xf32>
    %129 = arith.addf %126, %128 : vector<1x128xf32>
    %130 = math.tanh %129 : vector<1x128xf32>
    %131 = arith.negf %129 : vector<1x128xf32>
    %132 = math.exp %131 : vector<1x128xf32>
    %cst_33 = arith.constant 1.000000e+00 : f32
    %133 = vector.broadcast %cst_33 : f32 to vector<1x128xf32>
    %134 = arith.addf %133, %132 : vector<1x128xf32>
    %135 = arith.divf %133, %134 : vector<1x128xf32>
    %136 = arith.select %5, %130, %135 : vector<1x128xi1>, vector<1x128xf32>
    %137 = vector.extract_strided_slice %136 {offsets = [0, 0], sizes = [1, 32], strides = [1, 1]} : vector<1x128xf32> to vector<1x32xf32>
    %138 = vector.extract_strided_slice %136 {offsets = [0, 32], sizes = [1, 32], strides = [1, 1]} : vector<1x128xf32> to vector<1x32xf32>
    %139 = vector.extract_strided_slice %136 {offsets = [0, 64], sizes = [1, 32], strides = [1, 1]} : vector<1x128xf32> to vector<1x32xf32>
    %140 = vector.extract_strided_slice %136 {offsets = [0, 96], sizes = [1, 32], strides = [1, 1]} : vector<1x128xf32> to vector<1x32xf32>
    %141 = arith.mulf %138, %121 : vector<1x32xf32>
    %142 = arith.mulf %137, %139 : vector<1x32xf32>
    %143 = arith.addf %141, %142 : vector<1x32xf32>
    %144 = math.tanh %143 : vector<1x32xf32>
    %145 = arith.mulf %140, %144 : vector<1x32xf32>
    %146 = arith.index_cast %c5_i32 : i32 to index
    %c0_34 = arith.constant 0 : index
    %147 = vector.load %arg13[%146, %c0_34] : memref<8x32xf32, #tpu.memory_space<vmem>>, vector<1x32xf32>
    tpu.vector_store %arg13[%146, %c0_34], %145 {strides = array<i32>} : memref<8x32xf32, #tpu.memory_space<vmem>>, vector<1x32xf32>,
    %c6_i32 = arith.constant 6 : i32
    %cst_35 = arith.constant dense<0.000000e+00> : vector<1x128xf32>
    %148 = tpu.matmul %145, %13, %cst_35 {dimension_numbers = #tpu.dot_dimension_numbers<[1], [0], [0], [1], [0, 0, 1, 1], [], []>} : vector<1x32xf32>, vector<32x128xf32>, vector<1x128xf32> -> vector<1x128xf32>
    %149 = arith.index_cast %c6_i32 : i32 to index
    %c0_36 = arith.constant 0 : index
    %150 = vector.load %arg12[%149, %c0_36] : memref<8x128xf32, #tpu.memory_space<vmem>>, vector<1x128xf32>
    %151 = arith.addf %148, %150 : vector<1x128xf32>
    %152 = math.tanh %151 : vector<1x128xf32>
    %153 = arith.negf %151 : vector<1x128xf32>
    %154 = math.exp %153 : vector<1x128xf32>
    %cst_37 = arith.constant 1.000000e+00 : f32
    %155 = vector.broadcast %cst_37 : f32 to vector<1x128xf32>
    %156 = arith.addf %155, %154 : vector<1x128xf32>
    %157 = arith.divf %155, %156 : vector<1x128xf32>
    %158 = arith.select %5, %152, %157 : vector<1x128xi1>, vector<1x128xf32>
    %159 = vector.extract_strided_slice %158 {offsets = [0, 0], sizes = [1, 32], strides = [1, 1]} : vector<1x128xf32> to vector<1x32xf32>
    %160 = vector.extract_strided_slice %158 {offsets = [0, 32], sizes = [1, 32], strides = [1, 1]} : vector<1x128xf32> to vector<1x32xf32>
    %161 = vector.extract_strided_slice %158 {offsets = [0, 64], sizes = [1, 32], strides = [1, 1]} : vector<1x128xf32> to vector<1x32xf32>
    %162 = vector.extract_strided_slice %158 {offsets = [0, 96], sizes = [1, 32], strides = [1, 1]} : vector<1x128xf32> to vector<1x32xf32>
    %163 = arith.mulf %160, %143 : vector<1x32xf32>
    %164 = arith.mulf %159, %161 : vector<1x32xf32>
    %165 = arith.addf %163, %164 : vector<1x32xf32>
    %166 = math.tanh %165 : vector<1x32xf32>
    %167 = arith.mulf %162, %166 : vector<1x32xf32>
    %168 = arith.index_cast %c6_i32 : i32 to index
    %c0_38 = arith.constant 0 : index
    %169 = vector.load %arg13[%168, %c0_38] : memref<8x32xf32, #tpu.memory_space<vmem>>, vector<1x32xf32>
    tpu.vector_store %arg13[%168, %c0_38], %167 {strides = array<i32>} : memref<8x32xf32, #tpu.memory_space<vmem>>, vector<1x32xf32>,
    %c7_i32 = arith.constant 7 : i32
    %cst_39 = arith.constant dense<0.000000e+00> : vector<1x128xf32>
    %170 = tpu.matmul %167, %13, %cst_39 {dimension_numbers = #tpu.dot_dimension_numbers<[1], [0], [0], [1], [0, 0, 1, 1], [], []>} : vector<1x32xf32>, vector<32x128xf32>, vector<1x128xf32> -> vector<1x128xf32>
    %171 = arith.index_cast %c7_i32 : i32 to index
    %c0_40 = arith.constant 0 : index
    %172 = vector.load %arg12[%171, %c0_40] : memref<8x128xf32, #tpu.memory_space<vmem>>, vector<1x128xf32>
    %173 = arith.addf %170, %172 : vector<1x128xf32>
    %174 = math.tanh %173 : vector<1x128xf32>
    %175 = arith.negf %173 : vector<1x128xf32>
    %176 = math.exp %175 : vector<1x128xf32>
    %cst_41 = arith.constant 1.000000e+00 : f32
    %177 = vector.broadcast %cst_41 : f32 to vector<1x128xf32>
    %178 = arith.addf %177, %176 : vector<1x128xf32>
    %179 = arith.divf %177, %178 : vector<1x128xf32>
    %180 = arith.select %5, %174, %179 : vector<1x128xi1>, vector<1x128xf32>
    %181 = vector.extract_strided_slice %180 {offsets = [0, 0], sizes = [1, 32], strides = [1, 1]} : vector<1x128xf32> to vector<1x32xf32>
    %182 = vector.extract_strided_slice %180 {offsets = [0, 32], sizes = [1, 32], strides = [1, 1]} : vector<1x128xf32> to vector<1x32xf32>
    %183 = vector.extract_strided_slice %180 {offsets = [0, 64], sizes = [1, 32], strides = [1, 1]} : vector<1x128xf32> to vector<1x32xf32>
    %184 = vector.extract_strided_slice %180 {offsets = [0, 96], sizes = [1, 32], strides = [1, 1]} : vector<1x128xf32> to vector<1x32xf32>
    %185 = arith.mulf %182, %165 : vector<1x32xf32>
    %186 = arith.mulf %181, %183 : vector<1x32xf32>
    %187 = arith.addf %185, %186 : vector<1x32xf32>
    %188 = math.tanh %187 : vector<1x32xf32>
    %189 = arith.mulf %184, %188 : vector<1x32xf32>
    %190 = arith.index_cast %c7_i32 : i32 to index
    %c0_42 = arith.constant 0 : index
    %191 = vector.load %arg13[%190, %c0_42] : memref<8x32xf32, #tpu.memory_space<vmem>>, vector<1x32xf32>
    tpu.vector_store %arg13[%190, %c0_42], %189 {strides = array<i32>} : memref<8x32xf32, #tpu.memory_space<vmem>>, vector<1x32xf32>,
    %c8_i32 = arith.constant 8 : i32
    %c0_43 = arith.constant 0 : index
    %c0_44 = arith.constant 0 : index
    %192 = vector.load %arg10[%c0_43, %c0_44] : memref<2x32xf32, #tpu.memory_space<vmem>>, vector<1x32xf32>
    tpu.vector_store %arg10[%c0_43, %c0_44], %189 {strides = array<i32>} : memref<2x32xf32, #tpu.memory_space<vmem>>, vector<1x32xf32>,
    %c0_45 = arith.constant 0 : index
    %c0_46 = arith.constant 0 : index
    %193 = vector.load %arg11[%c0_45, %c0_46] : memref<2x32xf32, #tpu.memory_space<vmem>>, vector<1x32xf32>
    tpu.vector_store %arg11[%c0_45, %c0_46], %187 {strides = array<i32>} : memref<2x32xf32, #tpu.memory_space<vmem>>, vector<1x32xf32>,
    %c0_47 = arith.constant 0 : index
    %c0_48 = arith.constant 0 : index
    %194 = vector.load %arg13[%c0_47, %c0_48] : memref<8x32xf32, #tpu.memory_space<vmem>>, vector<8x32xf32>
    %c0_49 = arith.constant 0 : index
    %c0_50 = arith.constant 0 : index
    %195 = vector.load %arg4[%c0_49, %c0_50] : memref<32x128xf32, #tpu.memory_space<vmem>>, vector<32x128xf32>
    %cst_51 = arith.constant dense<0.000000e+00> : vector<8x128xf32>
    %196 = tpu.matmul %194, %195, %cst_51 {dimension_numbers = #tpu.dot_dimension_numbers<[1], [0], [0], [1], [0, 0, 1, 1], [], []>} : vector<8x32xf32>, vector<32x128xf32>, vector<8x128xf32> -> vector<8x128xf32>
    %c0_52 = arith.constant 0 : index
    %c0_53 = arith.constant 0 : index
    %197 = vector.load %arg6[%c0_52, %c0_53] : memref<1x128xf32, #tpu.memory_space<vmem>>, vector<1x128xf32>
    %198 = vector.broadcast %197 : vector<1x128xf32> to vector<8x128xf32>
    %199 = arith.addf %196, %198 : vector<8x128xf32>
    %c0_54 = arith.constant 0 : index
    %c0_55 = arith.constant 0 : index
    %200 = vector.load %arg12[%c0_54, %c0_55] : memref<8x128xf32, #tpu.memory_space<vmem>>, vector<8x128xf32>
    tpu.vector_store %arg12[%c0_54, %c0_55], %199 {strides = array<i32>} : memref<8x128xf32, #tpu.memory_space<vmem>>, vector<8x128xf32>,
    %c0_56 = arith.constant 0 : index
    %c0_57 = arith.constant 0 : index
    %201 = vector.load %arg5[%c0_56, %c0_57] : memref<32x128xf32, #tpu.memory_space<vmem>>, vector<32x128xf32>
    %cst_58 = arith.constant 0.000000e+00 : f32
    %202 = vector.broadcast %cst_58 : f32 to vector<1x32xf32>
    %cst_59 = arith.constant 0.000000e+00 : f32
    %203 = vector.broadcast %cst_59 : f32 to vector<1x32xf32>
    %c0_i32_60 = arith.constant 0 : i32
    %cst_61 = arith.constant dense<0.000000e+00> : vector<1x128xf32>
    %204 = tpu.matmul %202, %201, %cst_61 {dimension_numbers = #tpu.dot_dimension_numbers<[1], [0], [0], [1], [0, 0, 1, 1], [], []>} : vector<1x32xf32>, vector<32x128xf32>, vector<1x128xf32> -> vector<1x128xf32>
    %205 = arith.index_cast %c0_i32_60 : i32 to index
    %c0_62 = arith.constant 0 : index
    %206 = vector.load %arg12[%205, %c0_62] : memref<8x128xf32, #tpu.memory_space<vmem>>, vector<1x128xf32>
    %207 = arith.addf %204, %206 : vector<1x128xf32>
    %208 = math.tanh %207 : vector<1x128xf32>
    %209 = arith.negf %207 : vector<1x128xf32>
    %210 = math.exp %209 : vector<1x128xf32>
    %cst_63 = arith.constant 1.000000e+00 : f32
    %211 = vector.broadcast %cst_63 : f32 to vector<1x128xf32>
    %212 = arith.addf %211, %210 : vector<1x128xf32>
    %213 = arith.divf %211, %212 : vector<1x128xf32>
    %214 = arith.select %5, %208, %213 : vector<1x128xi1>, vector<1x128xf32>
    %215 = vector.extract_strided_slice %214 {offsets = [0, 0], sizes = [1, 32], strides = [1, 1]} : vector<1x128xf32> to vector<1x32xf32>
    %216 = vector.extract_strided_slice %214 {offsets = [0, 32], sizes = [1, 32], strides = [1, 1]} : vector<1x128xf32> to vector<1x32xf32>
    %217 = vector.extract_strided_slice %214 {offsets = [0, 64], sizes = [1, 32], strides = [1, 1]} : vector<1x128xf32> to vector<1x32xf32>
    %218 = vector.extract_strided_slice %214 {offsets = [0, 96], sizes = [1, 32], strides = [1, 1]} : vector<1x128xf32> to vector<1x32xf32>
    %219 = arith.mulf %216, %203 : vector<1x32xf32>
    %220 = arith.mulf %215, %217 : vector<1x32xf32>
    %221 = arith.addf %219, %220 : vector<1x32xf32>
    %222 = math.tanh %221 : vector<1x32xf32>
    %223 = arith.mulf %218, %222 : vector<1x32xf32>
    %224 = arith.index_cast %c0_i32_60 : i32 to index
    %c0_64 = arith.constant 0 : index
    %225 = vector.load %arg13[%224, %c0_64] : memref<8x32xf32, #tpu.memory_space<vmem>>, vector<1x32xf32>
    tpu.vector_store %arg13[%224, %c0_64], %223 {strides = array<i32>} : memref<8x32xf32, #tpu.memory_space<vmem>>, vector<1x32xf32>,
    %c1_i32_65 = arith.constant 1 : i32
    %cst_66 = arith.constant dense<0.000000e+00> : vector<1x128xf32>
    %226 = tpu.matmul %223, %201, %cst_66 {dimension_numbers = #tpu.dot_dimension_numbers<[1], [0], [0], [1], [0, 0, 1, 1], [], []>} : vector<1x32xf32>, vector<32x128xf32>, vector<1x128xf32> -> vector<1x128xf32>
    %227 = arith.index_cast %c1_i32_65 : i32 to index
    %c0_67 = arith.constant 0 : index
    %228 = vector.load %arg12[%227, %c0_67] : memref<8x128xf32, #tpu.memory_space<vmem>>, vector<1x128xf32>
    %229 = arith.addf %226, %228 : vector<1x128xf32>
    %230 = math.tanh %229 : vector<1x128xf32>
    %231 = arith.negf %229 : vector<1x128xf32>
    %232 = math.exp %231 : vector<1x128xf32>
    %cst_68 = arith.constant 1.000000e+00 : f32
    %233 = vector.broadcast %cst_68 : f32 to vector<1x128xf32>
    %234 = arith.addf %233, %232 : vector<1x128xf32>
    %235 = arith.divf %233, %234 : vector<1x128xf32>
    %236 = arith.select %5, %230, %235 : vector<1x128xi1>, vector<1x128xf32>
    %237 = vector.extract_strided_slice %236 {offsets = [0, 0], sizes = [1, 32], strides = [1, 1]} : vector<1x128xf32> to vector<1x32xf32>
    %238 = vector.extract_strided_slice %236 {offsets = [0, 32], sizes = [1, 32], strides = [1, 1]} : vector<1x128xf32> to vector<1x32xf32>
    %239 = vector.extract_strided_slice %236 {offsets = [0, 64], sizes = [1, 32], strides = [1, 1]} : vector<1x128xf32> to vector<1x32xf32>
    %240 = vector.extract_strided_slice %236 {offsets = [0, 96], sizes = [1, 32], strides = [1, 1]} : vector<1x128xf32> to vector<1x32xf32>
    %241 = arith.mulf %238, %221 : vector<1x32xf32>
    %242 = arith.mulf %237, %239 : vector<1x32xf32>
    %243 = arith.addf %241, %242 : vector<1x32xf32>
    %244 = math.tanh %243 : vector<1x32xf32>
    %245 = arith.mulf %240, %244 : vector<1x32xf32>
    %246 = arith.index_cast %c1_i32_65 : i32 to index
    %c0_69 = arith.constant 0 : index
    %247 = vector.load %arg13[%246, %c0_69] : memref<8x32xf32, #tpu.memory_space<vmem>>, vector<1x32xf32>
    tpu.vector_store %arg13[%246, %c0_69], %245 {strides = array<i32>} : memref<8x32xf32, #tpu.memory_space<vmem>>, vector<1x32xf32>,
    %c2_i32_70 = arith.constant 2 : i32
    %cst_71 = arith.constant dense<0.000000e+00> : vector<1x128xf32>
    %248 = tpu.matmul %245, %201, %cst_71 {dimension_numbers = #tpu.dot_dimension_numbers<[1], [0], [0], [1], [0, 0, 1, 1], [], []>} : vector<1x32xf32>, vector<32x128xf32>, vector<1x128xf32> -> vector<1x128xf32>
    %249 = arith.index_cast %c2_i32_70 : i32 to index
    %c0_72 = arith.constant 0 : index
    %250 = vector.load %arg12[%249, %c0_72] : memref<8x128xf32, #tpu.memory_space<vmem>>, vector<1x128xf32>
    %251 = arith.addf %248, %250 : vector<1x128xf32>
    %252 = math.tanh %251 : vector<1x128xf32>
    %253 = arith.negf %251 : vector<1x128xf32>
    %254 = math.exp %253 : vector<1x128xf32>
    %cst_73 = arith.constant 1.000000e+00 : f32
    %255 = vector.broadcast %cst_73 : f32 to vector<1x128xf32>
    %256 = arith.addf %255, %254 : vector<1x128xf32>
    %257 = arith.divf %255, %256 : vector<1x128xf32>
    %258 = arith.select %5, %252, %257 : vector<1x128xi1>, vector<1x128xf32>
    %259 = vector.extract_strided_slice %258 {offsets = [0, 0], sizes = [1, 32], strides = [1, 1]} : vector<1x128xf32> to vector<1x32xf32>
    %260 = vector.extract_strided_slice %258 {offsets = [0, 32], sizes = [1, 32], strides = [1, 1]} : vector<1x128xf32> to vector<1x32xf32>
    %261 = vector.extract_strided_slice %258 {offsets = [0, 64], sizes = [1, 32], strides = [1, 1]} : vector<1x128xf32> to vector<1x32xf32>
    %262 = vector.extract_strided_slice %258 {offsets = [0, 96], sizes = [1, 32], strides = [1, 1]} : vector<1x128xf32> to vector<1x32xf32>
    %263 = arith.mulf %260, %243 : vector<1x32xf32>
    %264 = arith.mulf %259, %261 : vector<1x32xf32>
    %265 = arith.addf %263, %264 : vector<1x32xf32>
    %266 = math.tanh %265 : vector<1x32xf32>
    %267 = arith.mulf %262, %266 : vector<1x32xf32>
    %268 = arith.index_cast %c2_i32_70 : i32 to index
    %c0_74 = arith.constant 0 : index
    %269 = vector.load %arg13[%268, %c0_74] : memref<8x32xf32, #tpu.memory_space<vmem>>, vector<1x32xf32>
    tpu.vector_store %arg13[%268, %c0_74], %267 {strides = array<i32>} : memref<8x32xf32, #tpu.memory_space<vmem>>, vector<1x32xf32>,
    %c3_i32_75 = arith.constant 3 : i32
    %cst_76 = arith.constant dense<0.000000e+00> : vector<1x128xf32>
    %270 = tpu.matmul %267, %201, %cst_76 {dimension_numbers = #tpu.dot_dimension_numbers<[1], [0], [0], [1], [0, 0, 1, 1], [], []>} : vector<1x32xf32>, vector<32x128xf32>, vector<1x128xf32> -> vector<1x128xf32>
    %271 = arith.index_cast %c3_i32_75 : i32 to index
    %c0_77 = arith.constant 0 : index
    %272 = vector.load %arg12[%271, %c0_77] : memref<8x128xf32, #tpu.memory_space<vmem>>, vector<1x128xf32>
    %273 = arith.addf %270, %272 : vector<1x128xf32>
    %274 = math.tanh %273 : vector<1x128xf32>
    %275 = arith.negf %273 : vector<1x128xf32>
    %276 = math.exp %275 : vector<1x128xf32>
    %cst_78 = arith.constant 1.000000e+00 : f32
    %277 = vector.broadcast %cst_78 : f32 to vector<1x128xf32>
    %278 = arith.addf %277, %276 : vector<1x128xf32>
    %279 = arith.divf %277, %278 : vector<1x128xf32>
    %280 = arith.select %5, %274, %279 : vector<1x128xi1>, vector<1x128xf32>
    %281 = vector.extract_strided_slice %280 {offsets = [0, 0], sizes = [1, 32], strides = [1, 1]} : vector<1x128xf32> to vector<1x32xf32>
    %282 = vector.extract_strided_slice %280 {offsets = [0, 32], sizes = [1, 32], strides = [1, 1]} : vector<1x128xf32> to vector<1x32xf32>
    %283 = vector.extract_strided_slice %280 {offsets = [0, 64], sizes = [1, 32], strides = [1, 1]} : vector<1x128xf32> to vector<1x32xf32>
    %284 = vector.extract_strided_slice %280 {offsets = [0, 96], sizes = [1, 32], strides = [1, 1]} : vector<1x128xf32> to vector<1x32xf32>
    %285 = arith.mulf %282, %265 : vector<1x32xf32>
    %286 = arith.mulf %281, %283 : vector<1x32xf32>
    %287 = arith.addf %285, %286 : vector<1x32xf32>
    %288 = math.tanh %287 : vector<1x32xf32>
    %289 = arith.mulf %284, %288 : vector<1x32xf32>
    %290 = arith.index_cast %c3_i32_75 : i32 to index
    %c0_79 = arith.constant 0 : index
    %291 = vector.load %arg13[%290, %c0_79] : memref<8x32xf32, #tpu.memory_space<vmem>>, vector<1x32xf32>
    tpu.vector_store %arg13[%290, %c0_79], %289 {strides = array<i32>} : memref<8x32xf32, #tpu.memory_space<vmem>>, vector<1x32xf32>,
    %c4_i32_80 = arith.constant 4 : i32
    %cst_81 = arith.constant dense<0.000000e+00> : vector<1x128xf32>
    %292 = tpu.matmul %289, %201, %cst_81 {dimension_numbers = #tpu.dot_dimension_numbers<[1], [0], [0], [1], [0, 0, 1, 1], [], []>} : vector<1x32xf32>, vector<32x128xf32>, vector<1x128xf32> -> vector<1x128xf32>
    %293 = arith.index_cast %c4_i32_80 : i32 to index
    %c0_82 = arith.constant 0 : index
    %294 = vector.load %arg12[%293, %c0_82] : memref<8x128xf32, #tpu.memory_space<vmem>>, vector<1x128xf32>
    %295 = arith.addf %292, %294 : vector<1x128xf32>
    %296 = math.tanh %295 : vector<1x128xf32>
    %297 = arith.negf %295 : vector<1x128xf32>
    %298 = math.exp %297 : vector<1x128xf32>
    %cst_83 = arith.constant 1.000000e+00 : f32
    %299 = vector.broadcast %cst_83 : f32 to vector<1x128xf32>
    %300 = arith.addf %299, %298 : vector<1x128xf32>
    %301 = arith.divf %299, %300 : vector<1x128xf32>
    %302 = arith.select %5, %296, %301 : vector<1x128xi1>, vector<1x128xf32>
    %303 = vector.extract_strided_slice %302 {offsets = [0, 0], sizes = [1, 32], strides = [1, 1]} : vector<1x128xf32> to vector<1x32xf32>
    %304 = vector.extract_strided_slice %302 {offsets = [0, 32], sizes = [1, 32], strides = [1, 1]} : vector<1x128xf32> to vector<1x32xf32>
    %305 = vector.extract_strided_slice %302 {offsets = [0, 64], sizes = [1, 32], strides = [1, 1]} : vector<1x128xf32> to vector<1x32xf32>
    %306 = vector.extract_strided_slice %302 {offsets = [0, 96], sizes = [1, 32], strides = [1, 1]} : vector<1x128xf32> to vector<1x32xf32>
    %307 = arith.mulf %304, %287 : vector<1x32xf32>
    %308 = arith.mulf %303, %305 : vector<1x32xf32>
    %309 = arith.addf %307, %308 : vector<1x32xf32>
    %310 = math.tanh %309 : vector<1x32xf32>
    %311 = arith.mulf %306, %310 : vector<1x32xf32>
    %312 = arith.index_cast %c4_i32_80 : i32 to index
    %c0_84 = arith.constant 0 : index
    %313 = vector.load %arg13[%312, %c0_84] : memref<8x32xf32, #tpu.memory_space<vmem>>, vector<1x32xf32>
    tpu.vector_store %arg13[%312, %c0_84], %311 {strides = array<i32>} : memref<8x32xf32, #tpu.memory_space<vmem>>, vector<1x32xf32>,
    %c5_i32_85 = arith.constant 5 : i32
    %cst_86 = arith.constant dense<0.000000e+00> : vector<1x128xf32>
    %314 = tpu.matmul %311, %201, %cst_86 {dimension_numbers = #tpu.dot_dimension_numbers<[1], [0], [0], [1], [0, 0, 1, 1], [], []>} : vector<1x32xf32>, vector<32x128xf32>, vector<1x128xf32> -> vector<1x128xf32>
    %315 = arith.index_cast %c5_i32_85 : i32 to index
    %c0_87 = arith.constant 0 : index
    %316 = vector.load %arg12[%315, %c0_87] : memref<8x128xf32, #tpu.memory_space<vmem>>, vector<1x128xf32>
    %317 = arith.addf %314, %316 : vector<1x128xf32>
    %318 = math.tanh %317 : vector<1x128xf32>
    %319 = arith.negf %317 : vector<1x128xf32>
    %320 = math.exp %319 : vector<1x128xf32>
    %cst_88 = arith.constant 1.000000e+00 : f32
    %321 = vector.broadcast %cst_88 : f32 to vector<1x128xf32>
    %322 = arith.addf %321, %320 : vector<1x128xf32>
    %323 = arith.divf %321, %322 : vector<1x128xf32>
    %324 = arith.select %5, %318, %323 : vector<1x128xi1>, vector<1x128xf32>
    %325 = vector.extract_strided_slice %324 {offsets = [0, 0], sizes = [1, 32], strides = [1, 1]} : vector<1x128xf32> to vector<1x32xf32>
    %326 = vector.extract_strided_slice %324 {offsets = [0, 32], sizes = [1, 32], strides = [1, 1]} : vector<1x128xf32> to vector<1x32xf32>
    %327 = vector.extract_strided_slice %324 {offsets = [0, 64], sizes = [1, 32], strides = [1, 1]} : vector<1x128xf32> to vector<1x32xf32>
    %328 = vector.extract_strided_slice %324 {offsets = [0, 96], sizes = [1, 32], strides = [1, 1]} : vector<1x128xf32> to vector<1x32xf32>
    %329 = arith.mulf %326, %309 : vector<1x32xf32>
    %330 = arith.mulf %325, %327 : vector<1x32xf32>
    %331 = arith.addf %329, %330 : vector<1x32xf32>
    %332 = math.tanh %331 : vector<1x32xf32>
    %333 = arith.mulf %328, %332 : vector<1x32xf32>
    %334 = arith.index_cast %c5_i32_85 : i32 to index
    %c0_89 = arith.constant 0 : index
    %335 = vector.load %arg13[%334, %c0_89] : memref<8x32xf32, #tpu.memory_space<vmem>>, vector<1x32xf32>
    tpu.vector_store %arg13[%334, %c0_89], %333 {strides = array<i32>} : memref<8x32xf32, #tpu.memory_space<vmem>>, vector<1x32xf32>,
    %c6_i32_90 = arith.constant 6 : i32
    %cst_91 = arith.constant dense<0.000000e+00> : vector<1x128xf32>
    %336 = tpu.matmul %333, %201, %cst_91 {dimension_numbers = #tpu.dot_dimension_numbers<[1], [0], [0], [1], [0, 0, 1, 1], [], []>} : vector<1x32xf32>, vector<32x128xf32>, vector<1x128xf32> -> vector<1x128xf32>
    %337 = arith.index_cast %c6_i32_90 : i32 to index
    %c0_92 = arith.constant 0 : index
    %338 = vector.load %arg12[%337, %c0_92] : memref<8x128xf32, #tpu.memory_space<vmem>>, vector<1x128xf32>
    %339 = arith.addf %336, %338 : vector<1x128xf32>
    %340 = math.tanh %339 : vector<1x128xf32>
    %341 = arith.negf %339 : vector<1x128xf32>
    %342 = math.exp %341 : vector<1x128xf32>
    %cst_93 = arith.constant 1.000000e+00 : f32
    %343 = vector.broadcast %cst_93 : f32 to vector<1x128xf32>
    %344 = arith.addf %343, %342 : vector<1x128xf32>
    %345 = arith.divf %343, %344 : vector<1x128xf32>
    %346 = arith.select %5, %340, %345 : vector<1x128xi1>, vector<1x128xf32>
    %347 = vector.extract_strided_slice %346 {offsets = [0, 0], sizes = [1, 32], strides = [1, 1]} : vector<1x128xf32> to vector<1x32xf32>
    %348 = vector.extract_strided_slice %346 {offsets = [0, 32], sizes = [1, 32], strides = [1, 1]} : vector<1x128xf32> to vector<1x32xf32>
    %349 = vector.extract_strided_slice %346 {offsets = [0, 64], sizes = [1, 32], strides = [1, 1]} : vector<1x128xf32> to vector<1x32xf32>
    %350 = vector.extract_strided_slice %346 {offsets = [0, 96], sizes = [1, 32], strides = [1, 1]} : vector<1x128xf32> to vector<1x32xf32>
    %351 = arith.mulf %348, %331 : vector<1x32xf32>
    %352 = arith.mulf %347, %349 : vector<1x32xf32>
    %353 = arith.addf %351, %352 : vector<1x32xf32>
    %354 = math.tanh %353 : vector<1x32xf32>
    %355 = arith.mulf %350, %354 : vector<1x32xf32>
    %356 = arith.index_cast %c6_i32_90 : i32 to index
    %c0_94 = arith.constant 0 : index
    %357 = vector.load %arg13[%356, %c0_94] : memref<8x32xf32, #tpu.memory_space<vmem>>, vector<1x32xf32>
    tpu.vector_store %arg13[%356, %c0_94], %355 {strides = array<i32>} : memref<8x32xf32, #tpu.memory_space<vmem>>, vector<1x32xf32>,
    %c7_i32_95 = arith.constant 7 : i32
    %cst_96 = arith.constant dense<0.000000e+00> : vector<1x128xf32>
    %358 = tpu.matmul %355, %201, %cst_96 {dimension_numbers = #tpu.dot_dimension_numbers<[1], [0], [0], [1], [0, 0, 1, 1], [], []>} : vector<1x32xf32>, vector<32x128xf32>, vector<1x128xf32> -> vector<1x128xf32>
    %359 = arith.index_cast %c7_i32_95 : i32 to index
    %c0_97 = arith.constant 0 : index
    %360 = vector.load %arg12[%359, %c0_97] : memref<8x128xf32, #tpu.memory_space<vmem>>, vector<1x128xf32>
    %361 = arith.addf %358, %360 : vector<1x128xf32>
    %362 = math.tanh %361 : vector<1x128xf32>
    %363 = arith.negf %361 : vector<1x128xf32>
    %364 = math.exp %363 : vector<1x128xf32>
    %cst_98 = arith.constant 1.000000e+00 : f32
    %365 = vector.broadcast %cst_98 : f32 to vector<1x128xf32>
    %366 = arith.addf %365, %364 : vector<1x128xf32>
    %367 = arith.divf %365, %366 : vector<1x128xf32>
    %368 = arith.select %5, %362, %367 : vector<1x128xi1>, vector<1x128xf32>
    %369 = vector.extract_strided_slice %368 {offsets = [0, 0], sizes = [1, 32], strides = [1, 1]} : vector<1x128xf32> to vector<1x32xf32>
    %370 = vector.extract_strided_slice %368 {offsets = [0, 32], sizes = [1, 32], strides = [1, 1]} : vector<1x128xf32> to vector<1x32xf32>
    %371 = vector.extract_strided_slice %368 {offsets = [0, 64], sizes = [1, 32], strides = [1, 1]} : vector<1x128xf32> to vector<1x32xf32>
    %372 = vector.extract_strided_slice %368 {offsets = [0, 96], sizes = [1, 32], strides = [1, 1]} : vector<1x128xf32> to vector<1x32xf32>
    %373 = arith.mulf %370, %353 : vector<1x32xf32>
    %374 = arith.mulf %369, %371 : vector<1x32xf32>
    %375 = arith.addf %373, %374 : vector<1x32xf32>
    %376 = math.tanh %375 : vector<1x32xf32>
    %377 = arith.mulf %372, %376 : vector<1x32xf32>
    %378 = arith.index_cast %c7_i32_95 : i32 to index
    %c0_99 = arith.constant 0 : index
    %379 = vector.load %arg13[%378, %c0_99] : memref<8x32xf32, #tpu.memory_space<vmem>>, vector<1x32xf32>
    tpu.vector_store %arg13[%378, %c0_99], %377 {strides = array<i32>} : memref<8x32xf32, #tpu.memory_space<vmem>>, vector<1x32xf32>,
    %c8_i32_100 = arith.constant 8 : i32
    %c1 = arith.constant 1 : index
    %c0_101 = arith.constant 0 : index
    %380 = vector.load %arg10[%c1, %c0_101] : memref<2x32xf32, #tpu.memory_space<vmem>>, vector<1x32xf32>
    tpu.vector_store %arg10[%c1, %c0_101], %377 {strides = array<i32>} : memref<2x32xf32, #tpu.memory_space<vmem>>, vector<1x32xf32>,
    %c1_102 = arith.constant 1 : index
    %c0_103 = arith.constant 0 : index
    %381 = vector.load %arg11[%c1_102, %c0_103] : memref<2x32xf32, #tpu.memory_space<vmem>>, vector<1x32xf32>
    tpu.vector_store %arg11[%c1_102, %c0_103], %375 {strides = array<i32>} : memref<2x32xf32, #tpu.memory_space<vmem>>, vector<1x32xf32>,
    %c0_104 = arith.constant 0 : index
    %c0_105 = arith.constant 0 : index
    %382 = vector.load %arg13[%c0_104, %c0_105] : memref<8x32xf32, #tpu.memory_space<vmem>>, vector<8x32xf32>
    %c0_106 = arith.constant 0 : index
    %c0_107 = arith.constant 0 : index
    %383 = vector.load %arg7[%c0_106, %c0_107] : memref<32x128xf32, #tpu.memory_space<vmem>>, vector<32x128xf32>
    %cst_108 = arith.constant dense<0.000000e+00> : vector<8x128xf32>
    %384 = tpu.matmul %382, %383, %cst_108 {dimension_numbers = #tpu.dot_dimension_numbers<[1], [0], [0], [1], [0, 0, 1, 1], [], []>} : vector<8x32xf32>, vector<32x128xf32>, vector<8x128xf32> -> vector<8x128xf32>
    %c0_109 = arith.constant 0 : index
    %c0_110 = arith.constant 0 : index
    %385 = vector.load %arg8[%c0_109, %c0_110] : memref<1x128xf32, #tpu.memory_space<vmem>>, vector<1x128xf32>
    %386 = vector.broadcast %385 : vector<1x128xf32> to vector<8x128xf32>
    %387 = arith.addf %384, %386 : vector<8x128xf32>
    %c0_111 = arith.constant 0 : index
    %c0_112 = arith.constant 0 : index
    %388 = vector.load %arg9[%c0_111, %c0_112] : memref<8x128xf32, #tpu.memory_space<vmem>>, vector<8x128xf32>
    tpu.vector_store %arg9[%c0_111, %c0_112], %387 {strides = array<i32>} : memref<8x128xf32, #tpu.memory_space<vmem>>, vector<8x128xf32>,
    return
  }
}

</mosaic_0001>

<llo_original>
// kernel: tpu_custom_call.1
$region0: #{tpu_custom_call.1}
  #allocation0 [shape = 'u32[]', space=smem, size = 0x4, offset = 0x4, fixed_abs, tag = 'smem constant byte address 0x4 - core index']
  #allocation1 [shape = 'u32[144,128]{1,0:T(1,128)}', space=vmem, size = 0x12000, scoped, tag = 'internal scratch']
  #allocation2 [shape = 'f32[8,128]{1,0:T(8,128)}', space=vmem, size = 0x1000, scoped, tag = 'scratch operand']
  #allocation3 [shape = 'f32[8,32]{1,0:T(8,128)}', space=vmem, size = 0x1000, scoped, tag = 'scratch operand']
  %s0 = inlined_call_operand.vmem [shape: f32[8,4], index: 0, kind: input, shape index: {}]
  %s1 = inlined_call_operand.vmem [shape: f32[4,128], index: 1, kind: input, shape index: {}]
  %s2 = inlined_call_operand.hbm [shape: f32[32,128], index: 2, kind: input, shape index: {}]
  %s3 = inlined_call_operand.vmem [shape: f32[1,128], index: 3, kind: input, shape index: {}]
  %s4 = inlined_call_operand.hbm [shape: f32[32,128], index: 4, kind: input, shape index: {}]
  %s5 = inlined_call_operand.hbm [shape: f32[32,128], index: 5, kind: input, shape index: {}]
  %s6 = inlined_call_operand.vmem [shape: f32[1,128], index: 6, kind: input, shape index: {}]
  %s7 = inlined_call_operand.hbm [shape: f32[32,128], index: 7, kind: input, shape index: {}]
  %s8 = inlined_call_operand.vmem [shape: f32[1,128], index: 8, kind: input, shape index: {}]
  %s9 = inlined_call_operand.hbm [shape: f32[8,128], index: 9, kind: output, shape index: {0}]
  %s10 = inlined_call_operand.hbm [shape: f32[2,32], index: 10, kind: output, shape index: {1}]
  %s11 = inlined_call_operand.hbm [shape: f32[2,32], index: 11, kind: output, shape index: {2}]
  %12 = xla_tuple %s9, %s10, %s11
  %s13 = sld [smem:[#allocation0]]
  $region78: #{tpu_custom_call.1} parent=0
    _
  %s15 = ssub.s32 1, %s13
  %s16 = scalar_select 0, %s15, %s13
  $region1: #{tpu_custom_call.1} parent=0
    #allocation4 [shape = 'u8[16384]{0}', space=vmem, size = 0x4000, scoped, tag = 'input window, operand 2, single buffered']
    #allocation5 [shape = 's32[1]{0}', space=sflag, size = 0x4, scoped, tag = 'scoped memory for tpu_custom_call.1']
    #allocation6 [shape = 's32[1]{0}', space=sflag, size = 0x4, scoped, tag = 'scoped memory for tpu_custom_call.1']
    #allocation7 [shape = 'u8[16384]{0}', space=vmem, size = 0x4000, scoped, tag = 'input window, operand 4, single buffered']
    #allocation8 [shape = 's32[1]{0}', space=sflag, size = 0x4, scoped, tag = 'scoped memory for tpu_custom_call.1']
    #allocation9 [shape = 'u8[16384]{0}', space=vmem, size = 0x4000, scoped, tag = 'input window, operand 5, single buffered']
    #allocation10 [shape = 'u8[16384]{0}', space=vmem, size = 0x4000, scoped, tag = 'input window, operand 7, single buffered']
    #allocation11 [shape = 's32[1]{0}', space=sflag, size = 0x4, scoped, tag = 'scoped memory for tpu_custom_call.1']
    #allocation12 [shape = 'u8[4096]{0}', space=vmem, size = 0x1000, scoped, tag = 'output window, operand 0, single buffered']
    #allocation13 [shape = 'u8[1024]{0}', space=vmem, size = 0x400, scoped, tag = 'output window, operand 1, single buffered']
    #allocation14 [shape = 's32[1]{0}', space=sflag, size = 0x4, scoped, tag = 'scoped memory for tpu_custom_call.1']
    #allocation15 [shape = 'u8[1024]{0}', space=vmem, size = 0x400, scoped, tag = 'output window, operand 2, single buffered']
    %17 = vsyncpa [#allocation5], 0
    %18 = vsyncpa [#allocation8], 0
    %19 = vsyncpa [#allocation11], 0
    %20 = vsyncpa [#allocation6], 0
    %21 = vsyncpa [#allocation14], 0
    // Predicated region
    $region2: #{tpu_custom_call.1} parent=1 // pred_check
      _
    $region3: #{tpu_custom_call.1} parent=1 // pred_check_branch
      %23 = sbr.rel (0) target = $region5
    $region4: #{tpu_custom_call.1} parent=1 // pred_region
      _
    $region5: #{tpu_custom_call.1} parent=1 // pred_fallthru
      _
    // Predicated region
    $region6: #{tpu_custom_call.1} parent=1 // pred_check
      _
    $region7: #{tpu_custom_call.1} parent=1 // pred_check_branch
      %25 = sbr.rel (0) target = $region9
    $region8: #{tpu_custom_call.1} parent=1 // pred_region
      _
    $region9: #{tpu_custom_call.1} parent=1 // pred_fallthru
      _
    // Predicated region
    $region10: #{tpu_custom_call.1} parent=1 // pred_check
      _
    $region11: #{tpu_custom_call.1} parent=1 // pred_check_branch
      %27 = sbr.rel (0) target = $region13
    $region12: #{tpu_custom_call.1} parent=1 // pred_region
      %s29 = ssub.s32 512, 512
      %30 = vsyncadd [#allocation5], %s29
      %s31 = sshll.u32 [#allocation4], 4
      %s32 = int_to_ptr.vmem [resolvable:$true] %s31
      %37 = dma.hbm_to_vmem [thread:$0]  %s2, 512, %s32, [#allocation5], 128, 128, 8
    $region13: #{tpu_custom_call.1} parent=1 // pred_fallthru
      _
    // Predicated region
    $region14: #{tpu_custom_call.1} parent=1 // pred_check
      _
    $region15: #{tpu_custom_call.1} parent=1 // pred_check_branch
      %39 = sbr.rel (0) target = $region17
    $region16: #{tpu_custom_call.1} parent=1 // pred_region
      _
    $region17: #{tpu_custom_call.1} parent=1 // pred_fallthru
      _
    // Predicated region
    $region18: #{tpu_custom_call.1} parent=1 // pred_check
      _
    $region19: #{tpu_custom_call.1} parent=1 // pred_check_branch
      %41 = sbr.rel (0) target = $region21
    $region20: #{tpu_custom_call.1} parent=1 // pred_region
      %s43 = ssub.s32 512, 512
      %44 = vsyncadd [#allocation8], %s43
      %s45 = sshll.u32 [#allocation7], 4
      %s46 = int_to_ptr.vmem [resolvable:$true] %s45
      %51 = dma.hbm_to_vmem [thread:$0]  %s4, 512, %s46, [#allocation8], 128, 128, 8
    $region21: #{tpu_custom_call.1} parent=1 // pred_fallthru
      _
    // Predicated region
    $region22: #{tpu_custom_call.1} parent=1 // pred_check
      _
    $region23: #{tpu_custom_call.1} parent=1 // pred_check_branch
      %53 = sbr.rel (0) target = $region25
    $region24: #{tpu_custom_call.1} parent=1 // pred_region
      %s55 = ssub.s32 512, 512
      %56 = vsyncadd [#allocation8], %s55
      %s57 = sshll.u32 [#allocation9], 4
      %s58 = int_to_ptr.vmem [resolvable:$true] %s57
      %63 = dma.hbm_to_vmem [thread:$0]  %s5, 512, %s58, [#allocation8], 128, 128, 8
    $region25: #{tpu_custom_call.1} parent=1 // pred_fallthru
      _
    // Predicated region
    $region26: #{tpu_custom_call.1} parent=1 // pred_check
      _
    $region27: #{tpu_custom_call.1} parent=1 // pred_check_branch
      %65 = sbr.rel (0) target = $region29
    $region28: #{tpu_custom_call.1} parent=1 // pred_region
      _
    $region29: #{tpu_custom_call.1} parent=1 // pred_fallthru
      _
    // Predicated region
    $region30: #{tpu_custom_call.1} parent=1 // pred_check
      _
    $region31: #{tpu_custom_call.1} parent=1 // pred_check_branch
      %67 = sbr.rel (0) target = $region33
    $region32: #{tpu_custom_call.1} parent=1 // pred_region
      %s69 = ssub.s32 512, 512
      %70 = vsyncadd [#allocation11], %s69
      %s71 = sshll.u32 [#allocation10], 4
      %s72 = int_to_ptr.vmem [resolvable:$true] %s71
      %77 = dma.hbm_to_vmem [thread:$0]  %s7, 512, %s72, [#allocation11], 128, 128, 8
    $region33: #{tpu_custom_call.1} parent=1 // pred_fallthru
      _
    // Predicated region
    $region34: #{tpu_custom_call.1} parent=1 // pred_check
      _
    $region35: #{tpu_custom_call.1} parent=1 // pred_check_branch
      %79 = sbr.rel (0) target = $region37
    $region36: #{tpu_custom_call.1} parent=1 // pred_region
      _
    $region37: #{tpu_custom_call.1} parent=1 // pred_fallthru
      _
    // Predicated region
    $region38: #{tpu_custom_call.1} parent=1 // pred_check
      _
    $region39: #{tpu_custom_call.1} parent=1 // pred_check_branch
      %81 = sbr.rel (0) target = $region41
    $region40: #{tpu_custom_call.1} parent=1 // pred_region
      %82 = dma.done [#allocation5], 512
    $region41: #{tpu_custom_call.1} parent=1 // pred_fallthru
      _
    // Predicated region
    $region42: #{tpu_custom_call.1} parent=1 // pred_check
      _
    $region43: #{tpu_custom_call.1} parent=1 // pred_check_branch
      %84 = sbr.rel (0) target = $region45
    $region44: #{tpu_custom_call.1} parent=1 // pred_region
      %85 = dma.done [#allocation8], 512
    $region45: #{tpu_custom_call.1} parent=1 // pred_fallthru
      _
    // Predicated region
    $region46: #{tpu_custom_call.1} parent=1 // pred_check
      _
    $region47: #{tpu_custom_call.1} parent=1 // pred_check_branch
      %87 = sbr.rel (0) target = $region49
    $region48: #{tpu_custom_call.1} parent=1 // pred_region
      %88 = dma.done [#allocation8], 512
    $region49: #{tpu_custom_call.1} parent=1 // pred_fallthru
      _
    // Predicated region
    $region50: #{tpu_custom_call.1} parent=1 // pred_check
      _
    $region51: #{tpu_custom_call.1} parent=1 // pred_check_branch
      %90 = sbr.rel (0) target = $region53
    $region52: #{tpu_custom_call.1} parent=1 // pred_region
      %91 = dma.done [#allocation11], 512
    $region53: #{tpu_custom_call.1} parent=1 // pred_fallthru
      _
    %v92 = vlaneseq
    %v93 = vand.u32 %v92, 127
    %vm94 = vcmp.ge.s32.totalorder %v93, 64
    %vm95 = vcmp.lt.s32.totalorder %v93, 96
    %vm96 = vmand %vm94, %vm95
    %v97 = vld [vmem:[%s0] sm:$0xff]
    %v98 = vld [vmem:[%s1] sm:$0xf]
    %v99 = vld [vmem:[%s3] sm:$0x1]
    %v101 = vlaneseq
    %v102 = vshrl.u32 %v101, 7
    %v103 = vsub.s32 0, %v102
    %v104 = vrot.slane %v99, %v103
    %vm106 = vcmask 31744
    %v108 = vsel %vm106, %v97, 0
    %vm110 = vcmask 1043456
    %v112 = vsel %vm110, %v98, 0
    %114 = vmatprep.subr.mxu0 0.0
    %115 = vmatpush1.msra.mxu0 0.0
    %116 = vmatprep.subr.mxu0 0.0
    %117 = vmatpush1.msra.mxu0 0.0
    %118 = vmatprep.subr.mxu0 0.0
    %119 = vmatpush1.msra.mxu0 0.0
    %120 = vmatprep.subr.mxu0 0.0
    %121 = vmatpush1.msra.mxu0 0.0
    %122 = vmatprep.subr.mxu0 0.0
    %123 = vmatpush1.msra.mxu0 0.0
    %124 = vmatprep.subr.mxu0 0.0
    %125 = vmatpush1.msra.mxu0 0.0
    %126 = vmatprep.subr.mxu0 0.0
    %127 = vmatpush1.msra.mxu0 0.0
    %128 = vmatprep.subr.mxu0 0.0
    %129 = vmatpush1.msra.mxu0 0.0
    %130 = vmatprep.subr.mxu0 0.0
    %131 = vmatpush1.msra.mxu0 0.0
    %132 = vmatprep.subr.mxu0 0.0
    %133 = vmatpush1.msra.mxu0 0.0
    %134 = vmatprep.subr.mxu0 0.0
    %135 = vmatpush1.msra.mxu0 0.0
    %136 = vmatprep.subr.mxu0 0.0
    %137 = vmatpush1.msra.mxu0 0.0
    %138 = vmatprep.subr.mxu0 0.0
    %139 = vmatpush1.msra.mxu0 0.0
    %140 = vmatprep.subr.mxu0 0.0
    %141 = vmatpush1.msra.mxu0 0.0
    %142 = vmatprep.subr.mxu0 0.0
    %143 = vmatpush1.msra.mxu0 0.0
    %144 = vmatprep.subr.mxu0 0.0
    %145 = vmatpush1.msra.mxu0 %v112
    %146 = vmatprep.subr.mxu0 0.0
    %147 = vmatpush2.msra.mxu0 0.0
    %148 = vmatprep.subr.mxu0 0.0
    %149 = vmatpush2.msra.mxu0 0.0
    %150 = vmatprep.subr.mxu0 0.0
    %151 = vmatpush2.msra.mxu0 0.0
    %152 = vmatprep.subr.mxu0 0.0
    %153 = vmatpush2.msra.mxu0 0.0
    %154 = vmatprep.subr.mxu0 0.0
    %155 = vmatpush2.msra.mxu0 0.0
    %156 = vmatprep.subr.mxu0 0.0
    %157 = vmatpush2.msra.mxu0 0.0
    %158 = vmatprep.subr.mxu0 0.0
    %159 = vmatpush2.msra.mxu0 0.0
    %160 = vmatprep.subr.mxu0 0.0
    %161 = vmatpush2.msra.mxu0 0.0
    %162 = vmatprep.subr.mxu0 0.0
    %163 = vmatpush2.msra.mxu0 0.0
    %164 = vmatprep.subr.mxu0 0.0
    %165 = vmatpush2.msra.mxu0 0.0
    %166 = vmatprep.subr.mxu0 0.0
    %167 = vmatpush2.msra.mxu0 0.0
    %168 = vmatprep.subr.mxu0 0.0
    %169 = vmatpush2.msra.mxu0 0.0
    %170 = vmatprep.subr.mxu0 0.0
    %171 = vmatpush2.msra.mxu0 0.0
    %172 = vmatprep.subr.mxu0 0.0
    %173 = vmatpush2.msra.mxu0 0.0
    %174 = vmatprep.subr.mxu0 0.0
    %175 = vmatpush2.msra.mxu0 0.0
    %176 = vmatprep.subr.mxu0 0.0
    %177 = vmatpush2.msra.mxu0 0.0
    %178 = vmatprep.mubr.f32.mxu0 0.0
    %179 = vmatmul.mubr.f32.gmra.mxu0 %v108
    %v180 = vpop.f32.mrf.mxu0
    %v181 = vadd.f32 %v104, %v180
    %v182 = vpop.f32.mrf.mxu0
    %183 = vdwg.mxu0
    %184 = vst [vmem:[#allocation2] sm:$0xff] %v181
    %v185 = vld [vmem:[#allocation4] sm:$0xff]
    %v186 = vld [vmem:[#allocation4 + $0x8] sm:$0xff]
    %v187 = vld [vmem:[#allocation4 + $0x10] sm:$0xff]
    %v188 = vld [vmem:[#allocation4 + $0x18] sm:$0xff]
    %v189 = vld [vmem:[#allocation2] sm:$0x1]
    %vm190 = vcmask 261120
    %v192 = vsel %vm190, 0.0, 0
    %194 = vmatprep.subr.mxu0 0.0
    %195 = vmatpush1.msra.mxu0 0.0
    %196 = vmatprep.subr.mxu0 0.0
    %197 = vmatpush1.msra.mxu0 0.0
    %198 = vmatprep.subr.mxu0 0.0
    %199 = vmatpush1.msra.mxu0 0.0
    %200 = vmatprep.subr.mxu0 0.0
    %201 = vmatpush1.msra.mxu0 0.0
    %202 = vmatprep.subr.mxu0 0.0
    %203 = vmatpush1.msra.mxu0 0.0
    %204 = vmatprep.subr.mxu0 0.0
    %205 = vmatpush1.msra.mxu0 0.0
    %206 = vmatprep.subr.mxu0 0.0
    %207 = vmatpush1.msra.mxu0 0.0
    %208 = vmatprep.subr.mxu0 0.0
    %209 = vmatpush1.msra.mxu0 0.0
    %210 = vmatprep.subr.mxu0 0.0
    %211 = vmatpush1.msra.mxu0 0.0
    %212 = vmatprep.subr.mxu0 0.0
    %213 = vmatpush1.msra.mxu0 0.0
    %214 = vmatprep.subr.mxu0 0.0
    %215 = vmatpush1.msra.mxu0 0.0
    %216 = vmatprep.subr.mxu0 0.0
    %217 = vmatpush1.msra.mxu0 0.0
    %218 = vmatprep.subr.mxu0 0.0
    %219 = vmatpush1.msra.mxu0 %v188
    %220 = vmatprep.subr.mxu0 0.0
    %221 = vmatpush1.msra.mxu0 %v187
    %222 = vmatprep.subr.mxu0 0.0
    %223 = vmatpush1.msra.mxu0 %v186
    %224 = vmatprep.subr.mxu0 0.0
    %225 = vmatpush1.msra.mxu0 %v185
    %226 = vmatprep.subr.mxu0 0.0
    %227 = vmatpush2.msra.mxu0 0.0
    %228 = vmatprep.subr.mxu0 0.0
    %229 = vmatpush2.msra.mxu0 0.0
    %230 = vmatprep.subr.mxu0 0.0
    %231 = vmatpush2.msra.mxu0 0.0
    %232 = vmatprep.subr.mxu0 0.0
    %233 = vmatpush2.msra.mxu0 0.0
    %234 = vmatprep.subr.mxu0 0.0
    %235 = vmatpush2.msra.mxu0 0.0
    %236 = vmatprep.subr.mxu0 0.0
    %237 = vmatpush2.msra.mxu0 0.0
    %238 = vmatprep.subr.mxu0 0.0
    %239 = vmatpush2.msra.mxu0 0.0
    %240 = vmatprep.subr.mxu0 0.0
    %241 = vmatpush2.msra.mxu0 0.0
    %242 = vmatprep.subr.mxu0 0.0
    %243 = vmatpush2.msra.mxu0 0.0
    %244 = vmatprep.subr.mxu0 0.0
    %245 = vmatpush2.msra.mxu0 0.0
    %246 = vmatprep.subr.mxu0 0.0
    %247 = vmatpush2.msra.mxu0 0.0
    %248 = vmatprep.subr.mxu0 0.0
    %249 = vmatpush2.msra.mxu0 0.0
    %250 = vmatprep.subr.mxu0 0.0
    %251 = vmatpush2.msra.mxu0 0.0
    %252 = vmatprep.subr.mxu0 0.0
    %253 = vmatpush2.msra.mxu0 0.0
    %254 = vmatprep.subr.mxu0 0.0
    %255 = vmatpush2.msra.mxu0 0.0
    %256 = vmatprep.subr.mxu0 0.0
    %257 = vmatpush2.msra.mxu0 0.0
    %258 = vmatprep.mubr.f32.mxu0 0.0
    %259 = vmatmul.mubr.f32.gmra.mxu0 %v192
    %v260 = vpop.f32.mrf.mxu0
    %v261 = vadd.f32 %v189, %v260
    %v262 = vpop.f32.mrf.mxu0
    %263 = vdwg.mxu0
    %v264 = vtanh.pop %v261
    %v265 = vxor.u32 %v261, 2147483648
    %v266 = vmul.f32 %v265, 1.442695
    %v267 = vpow.pop %v266
    %v268 = vadd.f32 %v267, 1.0
    %v269 = vrcp.pop %v268
    %v270 = vmul.f32 1.0, %v269
    %v271 = vsel %vm96, %v264, %v270
    %v272 = vmul.f32 %v271, 0.0
    %274 = vrot.lane.b32.xlu0 %v271, 64
    %v275 = vpop.permute.xlu0 %274
    %v277 = vmul.f32 %v271, %v275
    %279 = vrot.lane.b32.xlu0 %v277, 32
    %v280 = vpop.permute.xlu0 %279
    %v282 = vadd.f32 %v272, %v280
    %v283 = vtanh.pop %v282
    %285 = vrot.lane.b32.xlu0 %v283, 64
    %v286 = vpop.permute.xlu0 %285
    %v288 = vmul.f32 %v271, %v286
    %290 = vrot.lane.b32.xlu0 %v288, 32
    %v291 = vpop.permute.xlu0 %290
    %vm293 = vcmask 253952
    %294 = vst.msk [vmem:[#allocation3] sm:$0x1] %vm293, %v291
    %v295 = vld [vmem:[#allocation2 + $0x1] sm:$0x1]
    %v296 = vsel %vm190, %v291, 0
    %298 = vmatprep.subr.mxu0 0.0
    %299 = vmatpush1.msra.mxu0 0.0
    %300 = vmatprep.subr.mxu0 0.0
    %301 = vmatpush1.msra.mxu0 0.0
    %302 = vmatprep.subr.mxu0 0.0
    %303 = vmatpush1.msra.mxu0 0.0
    %304 = vmatprep.subr.mxu0 0.0
    %305 = vmatpush1.msra.mxu0 0.0
    %306 = vmatprep.subr.mxu0 0.0
    %307 = vmatpush1.msra.mxu0 0.0
    %308 = vmatprep.subr.mxu0 0.0
    %309 = vmatpush1.msra.mxu0 0.0
    %310 = vmatprep.subr.mxu0 0.0
    %311 = vmatpush1.msra.mxu0 0.0
    %312 = vmatprep.subr.mxu0 0.0
    %313 = vmatpush1.msra.mxu0 0.0
    %314 = vmatprep.subr.mxu0 0.0
    %315 = vmatpush1.msra.mxu0 0.0
    %316 = vmatprep.subr.mxu0 0.0
    %317 = vmatpush1.msra.mxu0 0.0
    %318 = vmatprep.subr.mxu0 0.0
    %319 = vmatpush1.msra.mxu0 0.0
    %320 = vmatprep.subr.mxu0 0.0
    %321 = vmatpush1.msra.mxu0 0.0
    %322 = vmatprep.subr.mxu0 0.0
    %323 = vmatpush1.msra.mxu0 %v188
    %324 = vmatprep.subr.mxu0 0.0
    %325 = vmatpush1.msra.mxu0 %v187
    %326 = vmatprep.subr.mxu0 0.0
    %327 = vmatpush1.msra.mxu0 %v186
    %328 = vmatprep.subr.mxu0 0.0
    %329 = vmatpush1.msra.mxu0 %v185
    %330 = vmatprep.subr.mxu0 0.0
    %331 = vmatpush2.msra.mxu0 0.0
    %332 = vmatprep.subr.mxu0 0.0
    %333 = vmatpush2.msra.mxu0 0.0
    %334 = vmatprep.subr.mxu0 0.0
    %335 = vmatpush2.msra.mxu0 0.0
    %336 = vmatprep.subr.mxu0 0.0
    %337 = vmatpush2.msra.mxu0 0.0
    %338 = vmatprep.subr.mxu0 0.0
    %339 = vmatpush2.msra.mxu0 0.0
    %340 = vmatprep.subr.mxu0 0.0
    %341 = vmatpush2.msra.mxu0 0.0
    %342 = vmatprep.subr.mxu0 0.0
    %343 = vmatpush2.msra.mxu0 0.0
    %344 = vmatprep.subr.mxu0 0.0
    %345 = vmatpush2.msra.mxu0 0.0
    %346 = vmatprep.subr.mxu0 0.0
    %347 = vmatpush2.msra.mxu0 0.0
    %348 = vmatprep.subr.mxu0 0.0
    %349 = vmatpush2.msra.mxu0 0.0
    %350 = vmatprep.subr.mxu0 0.0
    %351 = vmatpush2.msra.mxu0 0.0
    %352 = vmatprep.subr.mxu0 0.0
    %353 = vmatpush2.msra.mxu0 0.0
    %354 = vmatprep.subr.mxu0 0.0
    %355 = vmatpush2.msra.mxu0 0.0
    %356 = vmatprep.subr.mxu0 0.0
    %357 = vmatpush2.msra.mxu0 0.0
    %358 = vmatprep.subr.mxu0 0.0
    %359 = vmatpush2.msra.mxu0 0.0
    %360 = vmatprep.subr.mxu0 0.0
    %361 = vmatpush2.msra.mxu0 0.0
    %362 = vmatprep.mubr.f32.mxu0 0.0
    %363 = vmatmul.mubr.f32.gmra.mxu0 %v296
    %v364 = vpop.f32.mrf.mxu0
    %v365 = vadd.f32 %v295, %v364
    %v366 = vpop.f32.mrf.mxu0
    %367 = vdwg.mxu0
    %v368 = vtanh.pop %v365
    %v369 = vxor.u32 %v365, 2147483648
    %v370 = vmul.f32 %v369, 1.442695
    %v371 = vpow.pop %v370
    %v372 = vadd.f32 %v371, 1.0
    %v373 = vrcp.pop %v372
    %v374 = vmul.f32 1.0, %v373
    %v375 = vsel %vm96, %v368, %v374
    %v376 = vmul.f32 %v375, %v282
    %378 = vrot.lane.b32.xlu0 %v375, 64
    %v379 = vpop.permute.xlu0 %378
    %v381 = vmul.f32 %v375, %v379
    %383 = vrot.lane.b32.xlu0 %v381, 32
    %v384 = vpop.permute.xlu0 %383
    %v386 = vadd.f32 %v376, %v384
    %v387 = vtanh.pop %v386
    %389 = vrot.lane.b32.xlu0 %v387, 64
    %v390 = vpop.permute.xlu0 %389
    %v392 = vmul.f32 %v375, %v390
    %394 = vrot.lane.b32.xlu0 %v392, 32
    %v395 = vpop.permute.xlu0 %394
    %397 = vst.msk [vmem:[#allocation3 + $0x1] sm:$0x1] %vm293, %v395
    %v398 = vld [vmem:[#allocation2 + $0x2] sm:$0x1]
    %v399 = vsel %vm190, %v395, 0
    %401 = vmatprep.subr.mxu0 0.0
    %402 = vmatpush1.msra.mxu0 0.0
    %403 = vmatprep.subr.mxu0 0.0
    %404 = vmatpush1.msra.mxu0 0.0
    %405 = vmatprep.subr.mxu0 0.0
    %406 = vmatpush1.msra.mxu0 0.0
    %407 = vmatprep.subr.mxu0 0.0
    %408 = vmatpush1.msra.mxu0 0.0
    %409 = vmatprep.subr.mxu0 0.0
    %410 = vmatpush1.msra.mxu0 0.0
    %411 = vmatprep.subr.mxu0 0.0
    %412 = vmatpush1.msra.mxu0 0.0
    %413 = vmatprep.subr.mxu0 0.0
    %414 = vmatpush1.msra.mxu0 0.0
    %415 = vmatprep.subr.mxu0 0.0
    %416 = vmatpush1.msra.mxu0 0.0
    %417 = vmatprep.subr.mxu0 0.0
    %418 = vmatpush1.msra.mxu0 0.0
    %419 = vmatprep.subr.mxu0 0.0
    %420 = vmatpush1.msra.mxu0 0.0
    %421 = vmatprep.subr.mxu0 0.0
    %422 = vmatpush1.msra.mxu0 0.0
    %423 = vmatprep.subr.mxu0 0.0
    %424 = vmatpush1.msra.mxu0 0.0
    %425 = vmatprep.subr.mxu0 0.0
    %426 = vmatpush1.msra.mxu0 %v188
    %427 = vmatprep.subr.mxu0 0.0
    %428 = vmatpush1.msra.mxu0 %v187
    %429 = vmatprep.subr.mxu0 0.0
    %430 = vmatpush1.msra.mxu0 %v186
    %431 = vmatprep.subr.mxu0 0.0
    %432 = vmatpush1.msra.mxu0 %v185
    %433 = vmatprep.subr.mxu0 0.0
    %434 = vmatpush2.msra.mxu0 0.0
    %435 = vmatprep.subr.mxu0 0.0
    %436 = vmatpush2.msra.mxu0 0.0
    %437 = vmatprep.subr.mxu0 0.0
    %438 = vmatpush2.msra.mxu0 0.0
    %439 = vmatprep.subr.mxu0 0.0
    %440 = vmatpush2.msra.mxu0 0.0
    %441 = vmatprep.subr.mxu0 0.0
    %442 = vmatpush2.msra.mxu0 0.0
    %443 = vmatprep.subr.mxu0 0.0
    %444 = vmatpush2.msra.mxu0 0.0
    %445 = vmatprep.subr.mxu0 0.0
    %446 = vmatpush2.msra.mxu0 0.0
    %447 = vmatprep.subr.mxu0 0.0
    %448 = vmatpush2.msra.mxu0 0.0
    %449 = vmatprep.subr.mxu0 0.0
    %450 = vmatpush2.msra.mxu0 0.0
    %451 = vmatprep.subr.mxu0 0.0
    %452 = vmatpush2.msra.mxu0 0.0
    %453 = vmatprep.subr.mxu0 0.0
    %454 = vmatpush2.msra.mxu0 0.0
    %455 = vmatprep.subr.mxu0 0.0
    %456 = vmatpush2.msra.mxu0 0.0
    %457 = vmatprep.subr.mxu0 0.0
    %458 = vmatpush2.msra.mxu0 0.0
    %459 = vmatprep.subr.mxu0 0.0
    %460 = vmatpush2.msra.mxu0 0.0
    %461 = vmatprep.subr.mxu0 0.0
    %462 = vmatpush2.msra.mxu0 0.0
    %463 = vmatprep.subr.mxu0 0.0
    %464 = vmatpush2.msra.mxu0 0.0
    %465 = vmatprep.mubr.f32.mxu0 0.0
    %466 = vmatmul.mubr.f32.gmra.mxu0 %v399
    %v467 = vpop.f32.mrf.mxu0
    %v468 = vadd.f32 %v398, %v467
    %v469 = vpop.f32.mrf.mxu0
    %470 = vdwg.mxu0
    %v471 = vtanh.pop %v468
    %v472 = vxor.u32 %v468, 2147483648
    %v473 = vmul.f32 %v472, 1.442695
    %v474 = vpow.pop %v473
    %v475 = vadd.f32 %v474, 1.0
    %v476 = vrcp.pop %v475
    %v477 = vmul.f32 1.0, %v476
    %v478 = vsel %vm96, %v471, %v477
    %v479 = vmul.f32 %v478, %v386
    %481 = vrot.lane.b32.xlu0 %v478, 64
    %v482 = vpop.permute.xlu0 %481
    %v484 = vmul.f32 %v478, %v482
    %486 = vrot.lane.b32.xlu0 %v484, 32
    %v487 = vpop.permute.xlu0 %486
    %v489 = vadd.f32 %v479, %v487
    %v490 = vtanh.pop %v489
    %492 = vrot.lane.b32.xlu0 %v490, 64
    %v493 = vpop.permute.xlu0 %492
    %v495 = vmul.f32 %v478, %v493
    %497 = vrot.lane.b32.xlu0 %v495, 32
    %v498 = vpop.permute.xlu0 %497
    %500 = vst.msk [vmem:[#allocation3 + $0x2] sm:$0x1] %vm293, %v498
    %v501 = vld [vmem:[#allocation2 + $0x3] sm:$0x1]
    %v502 = vsel %vm190, %v498, 0
    %504 = vmatprep.subr.mxu0 0.0
    %505 = vmatpush1.msra.mxu0 0.0
    %506 = vmatprep.subr.mxu0 0.0
    %507 = vmatpush1.msra.mxu0 0.0
    %508 = vmatprep.subr.mxu0 0.0
    %509 = vmatpush1.msra.mxu0 0.0
    %510 = vmatprep.subr.mxu0 0.0
    %511 = vmatpush1.msra.mxu0 0.0
    %512 = vmatprep.subr.mxu0 0.0
    %513 = vmatpush1.msra.mxu0 0.0
    %514 = vmatprep.subr.mxu0 0.0
    %515 = vmatpush1.msra.mxu0 0.0
    %516 = vmatprep.subr.mxu0 0.0
    %517 = vmatpush1.msra.mxu0 0.0
    %518 = vmatprep.subr.mxu0 0.0
    %519 = vmatpush1.msra.mxu0 0.0
    %520 = vmatprep.subr.mxu0 0.0
    %521 = vmatpush1.msra.mxu0 0.0
    %522 = vmatprep.subr.mxu0 0.0
    %523 = vmatpush1.msra.mxu0 0.0
    %524 = vmatprep.subr.mxu0 0.0
    %525 = vmatpush1.msra.mxu0 0.0
    %526 = vmatprep.subr.mxu0 0.0
    %527 = vmatpush1.msra.mxu0 0.0
    %528 = vmatprep.subr.mxu0 0.0
    %529 = vmatpush1.msra.mxu0 %v188
    %530 = vmatprep.subr.mxu0 0.0
    %531 = vmatpush1.msra.mxu0 %v187
    %532 = vmatprep.subr.mxu0 0.0
    %533 = vmatpush1.msra.mxu0 %v186
    %534 = vmatprep.subr.mxu0 0.0
    %535 = vmatpush1.msra.mxu0 %v185
    %536 = vmatprep.subr.mxu0 0.0
    %537 = vmatpush2.msra.mxu0 0.0
    %538 = vmatprep.subr.mxu0 0.0
    %539 = vmatpush2.msra.mxu0 0.0
    %540 = vmatprep.subr.mxu0 0.0
    %541 = vmatpush2.msra.mxu0 0.0
    %542 = vmatprep.subr.mxu0 0.0
    %543 = vmatpush2.msra.mxu0 0.0
    %544 = vmatprep.subr.mxu0 0.0
    %545 = vmatpush2.msra.mxu0 0.0
    %546 = vmatprep.subr.mxu0 0.0
    %547 = vmatpush2.msra.mxu0 0.0
    %548 = vmatprep.subr.mxu0 0.0
    %549 = vmatpush2.msra.mxu0 0.0
    %550 = vmatprep.subr.mxu0 0.0
    %551 = vmatpush2.msra.mxu0 0.0
    %552 = vmatprep.subr.mxu0 0.0
    %553 = vmatpush2.msra.mxu0 0.0
    %554 = vmatprep.subr.mxu0 0.0
    %555 = vmatpush2.msra.mxu0 0.0
    %556 = vmatprep.subr.mxu0 0.0
    %557 = vmatpush2.msra.mxu0 0.0
    %558 = vmatprep.subr.mxu0 0.0
    %559 = vmatpush2.msra.mxu0 0.0
    %560 = vmatprep.subr.mxu0 0.0
    %561 = vmatpush2.msra.mxu0 0.0
    %562 = vmatprep.subr.mxu0 0.0
    %563 = vmatpush2.msra.mxu0 0.0
    %564 = vmatprep.subr.mxu0 0.0
    %565 = vmatpush2.msra.mxu0 0.0
    %566 = vmatprep.subr.mxu0 0.0
    %567 = vmatpush2.msra.mxu0 0.0
    %568 = vmatprep.mubr.f32.mxu0 0.0
    %569 = vmatmul.mubr.f32.gmra.mxu0 %v502
    %v570 = vpop.f32.mrf.mxu0
    %v571 = vadd.f32 %v501, %v570
    %v572 = vpop.f32.mrf.mxu0
    %573 = vdwg.mxu0
    %v574 = vtanh.pop %v571
    %v575 = vxor.u32 %v571, 2147483648
    %v576 = vmul.f32 %v575, 1.442695
    %v577 = vpow.pop %v576
    %v578 = vadd.f32 %v577, 1.0
    %v579 = vrcp.pop %v578
    %v580 = vmul.f32 1.0, %v579
    %v581 = vsel %vm96, %v574, %v580
    %v582 = vmul.f32 %v581, %v489
    %584 = vrot.lane.b32.xlu0 %v581, 64
    %v585 = vpop.permute.xlu0 %584
    %v587 = vmul.f32 %v581, %v585
    %589 = vrot.lane.b32.xlu0 %v587, 32
    %v590 = vpop.permute.xlu0 %589
    %v592 = vadd.f32 %v582, %v590
    %v593 = vtanh.pop %v592
    %595 = vrot.lane.b32.xlu0 %v593, 64
    %v596 = vpop.permute.xlu0 %595
    %v598 = vmul.f32 %v581, %v596
    %600 = vrot.lane.b32.xlu0 %v598, 32
    %v601 = vpop.permute.xlu0 %600
    %603 = vst.msk [vmem:[#allocation3 + $0x3] sm:$0x1] %vm293, %v601
    %v604 = vld [vmem:[#allocation2 + $0x4] sm:$0x1]
    %v605 = vsel %vm190, %v601, 0
    %607 = vmatprep.subr.mxu0 0.0
    %608 = vmatpush1.msra.mxu0 0.0
    %609 = vmatprep.subr.mxu0 0.0
    %610 = vmatpush1.msra.mxu0 0.0
    %611 = vmatprep.subr.mxu0 0.0
    %612 = vmatpush1.msra.mxu0 0.0
    %613 = vmatprep.subr.mxu0 0.0
    %614 = vmatpush1.msra.mxu0 0.0
    %615 = vmatprep.subr.mxu0 0.0
    %616 = vmatpush1.msra.mxu0 0.0
    %617 = vmatprep.subr.mxu0 0.0
    %618 = vmatpush1.msra.mxu0 0.0
    %619 = vmatprep.subr.mxu0 0.0
    %620 = vmatpush1.msra.mxu0 0.0
    %621 = vmatprep.subr.mxu0 0.0
    %622 = vmatpush1.msra.mxu0 0.0
    %623 = vmatprep.subr.mxu0 0.0
    %624 = vmatpush1.msra.mxu0 0.0
    %625 = vmatprep.subr.mxu0 0.0
    %626 = vmatpush1.msra.mxu0 0.0
    %627 = vmatprep.subr.mxu0 0.0
    %628 = vmatpush1.msra.mxu0 0.0
    %629 = vmatprep.subr.mxu0 0.0
    %630 = vmatpush1.msra.mxu0 0.0
    %631 = vmatprep.subr.mxu0 0.0
    %632 = vmatpush1.msra.mxu0 %v188
    %633 = vmatprep.subr.mxu0 0.0
    %634 = vmatpush1.msra.mxu0 %v187
    %635 = vmatprep.subr.mxu0 0.0
    %636 = vmatpush1.msra.mxu0 %v186
    %637 = vmatprep.subr.mxu0 0.0
    %638 = vmatpush1.msra.mxu0 %v185
    %639 = vmatprep.subr.mxu0 0.0
    %640 = vmatpush2.msra.mxu0 0.0
    %641 = vmatprep.subr.mxu0 0.0
    %642 = vmatpush2.msra.mxu0 0.0
    %643 = vmatprep.subr.mxu0 0.0
    %644 = vmatpush2.msra.mxu0 0.0
    %645 = vmatprep.subr.mxu0 0.0
    %646 = vmatpush2.msra.mxu0 0.0
    %647 = vmatprep.subr.mxu0 0.0
    %648 = vmatpush2.msra.mxu0 0.0
    %649 = vmatprep.subr.mxu0 0.0
    %650 = vmatpush2.msra.mxu0 0.0
    %651 = vmatprep.subr.mxu0 0.0
    %652 = vmatpush2.msra.mxu0 0.0
    %653 = vmatprep.subr.mxu0 0.0
    %654 = vmatpush2.msra.mxu0 0.0
    %655 = vmatprep.subr.mxu0 0.0
    %656 = vmatpush2.msra.mxu0 0.0
    %657 = vmatprep.subr.mxu0 0.0
    %658 = vmatpush2.msra.mxu0 0.0
    %659 = vmatprep.subr.mxu0 0.0
    %660 = vmatpush2.msra.mxu0 0.0
    %661 = vmatprep.subr.mxu0 0.0
    %662 = vmatpush2.msra.mxu0 0.0
    %663 = vmatprep.subr.mxu0 0.0
    %664 = vmatpush2.msra.mxu0 0.0
    %665 = vmatprep.subr.mxu0 0.0
    %666 = vmatpush2.msra.mxu0 0.0
    %667 = vmatprep.subr.mxu0 0.0
    %668 = vmatpush2.msra.mxu0 0.0
    %669 = vmatprep.subr.mxu0 0.0
    %670 = vmatpush2.msra.mxu0 0.0
    %671 = vmatprep.mubr.f32.mxu0 0.0
    %672 = vmatmul.mubr.f32.gmra.mxu0 %v605
    %v673 = vpop.f32.mrf.mxu0
    %v674 = vadd.f32 %v604, %v673
    %v675 = vpop.f32.mrf.mxu0
    %676 = vdwg.mxu0
    %v677 = vtanh.pop %v674
    %v678 = vxor.u32 %v674, 2147483648
    %v679 = vmul.f32 %v678, 1.442695
    %v680 = vpow.pop %v679
    %v681 = vadd.f32 %v680, 1.0
    %v682 = vrcp.pop %v681
    %v683 = vmul.f32 1.0, %v682
    %v684 = vsel %vm96, %v677, %v683
    %v685 = vmul.f32 %v684, %v592
    %687 = vrot.lane.b32.xlu0 %v684, 64
    %v688 = vpop.permute.xlu0 %687
    %v690 = vmul.f32 %v684, %v688
    %692 = vrot.lane.b32.xlu0 %v690, 32
    %v693 = vpop.permute.xlu0 %692
    %v695 = vadd.f32 %v685, %v693
    %v696 = vtanh.pop %v695
    %698 = vrot.lane.b32.xlu0 %v696, 64
    %v699 = vpop.permute.xlu0 %698
    %v701 = vmul.f32 %v684, %v699
    %703 = vrot.lane.b32.xlu0 %v701, 32
    %v704 = vpop.permute.xlu0 %703
    %706 = vst.msk [vmem:[#allocation3 + $0x4] sm:$0x1] %vm293, %v704
    %v707 = vld [vmem:[#allocation2 + $0x5] sm:$0x1]
    %v708 = vsel %vm190, %v704, 0
    %710 = vmatprep.subr.mxu0 0.0
    %711 = vmatpush1.msra.mxu0 0.0
    %712 = vmatprep.subr.mxu0 0.0
    %713 = vmatpush1.msra.mxu0 0.0
    %714 = vmatprep.subr.mxu0 0.0
    %715 = vmatpush1.msra.mxu0 0.0
    %716 = vmatprep.subr.mxu0 0.0
    %717 = vmatpush1.msra.mxu0 0.0
    %718 = vmatprep.subr.mxu0 0.0
    %719 = vmatpush1.msra.mxu0 0.0
    %720 = vmatprep.subr.mxu0 0.0
    %721 = vmatpush1.msra.mxu0 0.0
    %722 = vmatprep.subr.mxu0 0.0
    %723 = vmatpush1.msra.mxu0 0.0
    %724 = vmatprep.subr.mxu0 0.0
    %725 = vmatpush1.msra.mxu0 0.0
    %726 = vmatprep.subr.mxu0 0.0
    %727 = vmatpush1.msra.mxu0 0.0
    %728 = vmatprep.subr.mxu0 0.0
    %729 = vmatpush1.msra.mxu0 0.0
    %730 = vmatprep.subr.mxu0 0.0
    %731 = vmatpush1.msra.mxu0 0.0
    %732 = vmatprep.subr.mxu0 0.0
    %733 = vmatpush1.msra.mxu0 0.0
    %734 = vmatprep.subr.mxu0 0.0
    %735 = vmatpush1.msra.mxu0 %v188
    %736 = vmatprep.subr.mxu0 0.0
    %737 = vmatpush1.msra.mxu0 %v187
    %738 = vmatprep.subr.mxu0 0.0
    %739 = vmatpush1.msra.mxu0 %v186
    %740 = vmatprep.subr.mxu0 0.0
    %741 = vmatpush1.msra.mxu0 %v185
    %742 = vmatprep.subr.mxu0 0.0
    %743 = vmatpush2.msra.mxu0 0.0
    %744 = vmatprep.subr.mxu0 0.0
    %745 = vmatpush2.msra.mxu0 0.0
    %746 = vmatprep.subr.mxu0 0.0
    %747 = vmatpush2.msra.mxu0 0.0
    %748 = vmatprep.subr.mxu0 0.0
    %749 = vmatpush2.msra.mxu0 0.0
    %750 = vmatprep.subr.mxu0 0.0
    %751 = vmatpush2.msra.mxu0 0.0
    %752 = vmatprep.subr.mxu0 0.0
    %753 = vmatpush2.msra.mxu0 0.0
    %754 = vmatprep.subr.mxu0 0.0
    %755 = vmatpush2.msra.mxu0 0.0
    %756 = vmatprep.subr.mxu0 0.0
    %757 = vmatpush2.msra.mxu0 0.0
    %758 = vmatprep.subr.mxu0 0.0
    %759 = vmatpush2.msra.mxu0 0.0
    %760 = vmatprep.subr.mxu0 0.0
    %761 = vmatpush2.msra.mxu0 0.0
    %762 = vmatprep.subr.mxu0 0.0
    %763 = vmatpush2.msra.mxu0 0.0
    %764 = vmatprep.subr.mxu0 0.0
    %765 = vmatpush2.msra.mxu0 0.0
    %766 = vmatprep.subr.mxu0 0.0
    %767 = vmatpush2.msra.mxu0 0.0
    %768 = vmatprep.subr.mxu0 0.0
    %769 = vmatpush2.msra.mxu0 0.0
    %770 = vmatprep.subr.mxu0 0.0
    %771 = vmatpush2.msra.mxu0 0.0
    %772 = vmatprep.subr.mxu0 0.0
    %773 = vmatpush2.msra.mxu0 0.0
    %774 = vmatprep.mubr.f32.mxu0 0.0
    %775 = vmatmul.mubr.f32.gmra.mxu0 %v708
    %v776 = vpop.f32.mrf.mxu0
    %v777 = vadd.f32 %v707, %v776
    %v778 = vpop.f32.mrf.mxu0
    %779 = vdwg.mxu0
    %v780 = vtanh.pop %v777
    %v781 = vxor.u32 %v777, 2147483648
    %v782 = vmul.f32 %v781, 1.442695
    %v783 = vpow.pop %v782
    %v784 = vadd.f32 %v783, 1.0
    %v785 = vrcp.pop %v784
    %v786 = vmul.f32 1.0, %v785
    %v787 = vsel %vm96, %v780, %v786
    %v788 = vmul.f32 %v787, %v695
    %790 = vrot.lane.b32.xlu0 %v787, 64
    %v791 = vpop.permute.xlu0 %790
    %v793 = vmul.f32 %v787, %v791
    %795 = vrot.lane.b32.xlu0 %v793, 32
    %v796 = vpop.permute.xlu0 %795
    %v798 = vadd.f32 %v788, %v796
    %v799 = vtanh.pop %v798
    %801 = vrot.lane.b32.xlu0 %v799, 64
    %v802 = vpop.permute.xlu0 %801
    %v804 = vmul.f32 %v787, %v802
    %806 = vrot.lane.b32.xlu0 %v804, 32
    %v807 = vpop.permute.xlu0 %806
    %809 = vst.msk [vmem:[#allocation3 + $0x5] sm:$0x1] %vm293, %v807
    %v810 = vld [vmem:[#allocation2 + $0x6] sm:$0x1]
    %v811 = vsel %vm190, %v807, 0
    %813 = vmatprep.subr.mxu0 0.0
    %814 = vmatpush1.msra.mxu0 0.0
    %815 = vmatprep.subr.mxu0 0.0
    %816 = vmatpush1.msra.mxu0 0.0
    %817 = vmatprep.subr.mxu0 0.0
    %818 = vmatpush1.msra.mxu0 0.0
    %819 = vmatprep.subr.mxu0 0.0
    %820 = vmatpush1.msra.mxu0 0.0
    %821 = vmatprep.subr.mxu0 0.0
    %822 = vmatpush1.msra.mxu0 0.0
    %823 = vmatprep.subr.mxu0 0.0
    %824 = vmatpush1.msra.mxu0 0.0
    %825 = vmatprep.subr.mxu0 0.0
    %826 = vmatpush1.msra.mxu0 0.0
    %827 = vmatprep.subr.mxu0 0.0
    %828 = vmatpush1.msra.mxu0 0.0
    %829 = vmatprep.subr.mxu0 0.0
    %830 = vmatpush1.msra.mxu0 0.0
    %831 = vmatprep.subr.mxu0 0.0
    %832 = vmatpush1.msra.mxu0 0.0
    %833 = vmatprep.subr.mxu0 0.0
    %834 = vmatpush1.msra.mxu0 0.0
    %835 = vmatprep.subr.mxu0 0.0
    %836 = vmatpush1.msra.mxu0 0.0
    %837 = vmatprep.subr.mxu0 0.0
    %838 = vmatpush1.msra.mxu0 %v188
    %839 = vmatprep.subr.mxu0 0.0
    %840 = vmatpush1.msra.mxu0 %v187
    %841 = vmatprep.subr.mxu0 0.0
    %842 = vmatpush1.msra.mxu0 %v186
    %843 = vmatprep.subr.mxu0 0.0
    %844 = vmatpush1.msra.mxu0 %v185
    %845 = vmatprep.subr.mxu0 0.0
    %846 = vmatpush2.msra.mxu0 0.0
    %847 = vmatprep.subr.mxu0 0.0
    %848 = vmatpush2.msra.mxu0 0.0
    %849 = vmatprep.subr.mxu0 0.0
    %850 = vmatpush2.msra.mxu0 0.0
    %851 = vmatprep.subr.mxu0 0.0
    %852 = vmatpush2.msra.mxu0 0.0
    %853 = vmatprep.subr.mxu0 0.0
    %854 = vmatpush2.msra.mxu0 0.0
    %855 = vmatprep.subr.mxu0 0.0
    %856 = vmatpush2.msra.mxu0 0.0
    %857 = vmatprep.subr.mxu0 0.0
    %858 = vmatpush2.msra.mxu0 0.0
    %859 = vmatprep.subr.mxu0 0.0
    %860 = vmatpush2.msra.mxu0 0.0
    %861 = vmatprep.subr.mxu0 0.0
    %862 = vmatpush2.msra.mxu0 0.0
    %863 = vmatprep.subr.mxu0 0.0
    %864 = vmatpush2.msra.mxu0 0.0
    %865 = vmatprep.subr.mxu0 0.0
    %866 = vmatpush2.msra.mxu0 0.0
    %867 = vmatprep.subr.mxu0 0.0
    %868 = vmatpush2.msra.mxu0 0.0
    %869 = vmatprep.subr.mxu0 0.0
    %870 = vmatpush2.msra.mxu0 0.0
    %871 = vmatprep.subr.mxu0 0.0
    %872 = vmatpush2.msra.mxu0 0.0
    %873 = vmatprep.subr.mxu0 0.0
    %874 = vmatpush2.msra.mxu0 0.0
    %875 = vmatprep.subr.mxu0 0.0
    %876 = vmatpush2.msra.mxu0 0.0
    %877 = vmatprep.mubr.f32.mxu0 0.0
    %878 = vmatmul.mubr.f32.gmra.mxu0 %v811
    %v879 = vpop.f32.mrf.mxu0
    %v880 = vadd.f32 %v810, %v879
    %v881 = vpop.f32.mrf.mxu0
    %882 = vdwg.mxu0
    %v883 = vtanh.pop %v880
    %v884 = vxor.u32 %v880, 2147483648
    %v885 = vmul.f32 %v884, 1.442695
    %v886 = vpow.pop %v885
    %v887 = vadd.f32 %v886, 1.0
    %v888 = vrcp.pop %v887
    %v889 = vmul.f32 1.0, %v888
    %v890 = vsel %vm96, %v883, %v889
    %v891 = vmul.f32 %v890, %v798
    %893 = vrot.lane.b32.xlu0 %v890, 64
    %v894 = vpop.permute.xlu0 %893
    %v896 = vmul.f32 %v890, %v894
    %898 = vrot.lane.b32.xlu0 %v896, 32
    %v899 = vpop.permute.xlu0 %898
    %v901 = vadd.f32 %v891, %v899
    %v902 = vtanh.pop %v901
    %904 = vrot.lane.b32.xlu0 %v902, 64
    %v905 = vpop.permute.xlu0 %904
    %v907 = vmul.f32 %v890, %v905
    %909 = vrot.lane.b32.xlu0 %v907, 32
    %v910 = vpop.permute.xlu0 %909
    %912 = vst.msk [vmem:[#allocation3 + $0x6] sm:$0x1] %vm293, %v910
    %v913 = vld [vmem:[#allocation2 + $0x7] sm:$0x1]
    %v914 = vsel %vm190, %v910, 0
    %916 = vmatprep.subr.mxu0 0.0
    %917 = vmatpush1.msra.mxu0 0.0
    %918 = vmatprep.subr.mxu0 0.0
    %919 = vmatpush1.msra.mxu0 0.0
    %920 = vmatprep.subr.mxu0 0.0
    %921 = vmatpush1.msra.mxu0 0.0
    %922 = vmatprep.subr.mxu0 0.0
    %923 = vmatpush1.msra.mxu0 0.0
    %924 = vmatprep.subr.mxu0 0.0
    %925 = vmatpush1.msra.mxu0 0.0
    %926 = vmatprep.subr.mxu0 0.0
    %927 = vmatpush1.msra.mxu0 0.0
    %928 = vmatprep.subr.mxu0 0.0
    %929 = vmatpush1.msra.mxu0 0.0
    %930 = vmatprep.subr.mxu0 0.0
    %931 = vmatpush1.msra.mxu0 0.0
    %932 = vmatprep.subr.mxu0 0.0
    %933 = vmatpush1.msra.mxu0 0.0
    %934 = vmatprep.subr.mxu0 0.0
    %935 = vmatpush1.msra.mxu0 0.0
    %936 = vmatprep.subr.mxu0 0.0
    %937 = vmatpush1.msra.mxu0 0.0
    %938 = vmatprep.subr.mxu0 0.0
    %939 = vmatpush1.msra.mxu0 0.0
    %940 = vmatprep.subr.mxu0 0.0
    %941 = vmatpush1.msra.mxu0 %v188
    %942 = vmatprep.subr.mxu0 0.0
    %943 = vmatpush1.msra.mxu0 %v187
    %944 = vmatprep.subr.mxu0 0.0
    %945 = vmatpush1.msra.mxu0 %v186
    %946 = vmatprep.subr.mxu0 0.0
    %947 = vmatpush1.msra.mxu0 %v185
    %948 = vmatprep.subr.mxu0 0.0
    %949 = vmatpush2.msra.mxu0 0.0
    %950 = vmatprep.subr.mxu0 0.0
    %951 = vmatpush2.msra.mxu0 0.0
    %952 = vmatprep.subr.mxu0 0.0
    %953 = vmatpush2.msra.mxu0 0.0
    %954 = vmatprep.subr.mxu0 0.0
    %955 = vmatpush2.msra.mxu0 0.0
    %956 = vmatprep.subr.mxu0 0.0
    %957 = vmatpush2.msra.mxu0 0.0
    %958 = vmatprep.subr.mxu0 0.0
    %959 = vmatpush2.msra.mxu0 0.0
    %960 = vmatprep.subr.mxu0 0.0
    %961 = vmatpush2.msra.mxu0 0.0
    %962 = vmatprep.subr.mxu0 0.0
    %963 = vmatpush2.msra.mxu0 0.0
    %964 = vmatprep.subr.mxu0 0.0
    %965 = vmatpush2.msra.mxu0 0.0
    %966 = vmatprep.subr.mxu0 0.0
    %967 = vmatpush2.msra.mxu0 0.0
    %968 = vmatprep.subr.mxu0 0.0
    %969 = vmatpush2.msra.mxu0 0.0
    %970 = vmatprep.subr.mxu0 0.0
    %971 = vmatpush2.msra.mxu0 0.0
    %972 = vmatprep.subr.mxu0 0.0
    %973 = vmatpush2.msra.mxu0 0.0
    %974 = vmatprep.subr.mxu0 0.0
    %975 = vmatpush2.msra.mxu0 0.0
    %976 = vmatprep.subr.mxu0 0.0
    %977 = vmatpush2.msra.mxu0 0.0
    %978 = vmatprep.subr.mxu0 0.0
    %979 = vmatpush2.msra.mxu0 0.0
    %980 = vmatprep.mubr.f32.mxu0 0.0
    %981 = vmatmul.mubr.f32.gmra.mxu0 %v914
    %v982 = vpop.f32.mrf.mxu0
    %v983 = vadd.f32 %v913, %v982
    %v984 = vpop.f32.mrf.mxu0
    %985 = vdwg.mxu0
    %v986 = vtanh.pop %v983
    %v987 = vxor.u32 %v983, 2147483648
    %v988 = vmul.f32 %v987, 1.442695
    %v989 = vpow.pop %v988
    %v990 = vadd.f32 %v989, 1.0
    %v991 = vrcp.pop %v990
    %v992 = vmul.f32 1.0, %v991
    %v993 = vsel %vm96, %v986, %v992
    %v994 = vmul.f32 %v993, %v901
    %996 = vrot.lane.b32.xlu0 %v993, 64
    %v997 = vpop.permute.xlu0 %996
    %v999 = vmul.f32 %v993, %v997
    %1001 = vrot.lane.b32.xlu0 %v999, 32
    %v1002 = vpop.permute.xlu0 %1001
    %v1004 = vadd.f32 %v994, %v1002
    %v1005 = vtanh.pop %v1004
    %1007 = vrot.lane.b32.xlu0 %v1005, 64
    %v1008 = vpop.permute.xlu0 %1007
    %v1010 = vmul.f32 %v993, %v1008
    %1012 = vrot.lane.b32.xlu0 %v1010, 32
    %v1013 = vpop.permute.xlu0 %1012
    %1015 = vst.msk [vmem:[#allocation3 + $0x7] sm:$0x1] %vm293, %v1013
    %1016 = vst.msk [vmem:[#allocation13] sm:$0x1] %vm293, %v1013
    %1018 = vrot.lane.b32.xlu0 %v1004, 96
    %v1019 = vpop.permute.xlu0 %1018
    %1021 = vst.msk [vmem:[#allocation15] sm:$0x1] %vm293, %v1019
    %v1022 = vld [vmem:[#allocation3] sm:$0xff]
    %v1023 = vld [vmem:[#allocation7] sm:$0xff]
    %v1024 = vld [vmem:[#allocation7 + $0x8] sm:$0xff]
    %v1025 = vld [vmem:[#allocation7 + $0x10] sm:$0xff]
    %v1026 = vld [vmem:[#allocation7 + $0x18] sm:$0xff]
    %v1027 = vld [vmem:[%s6] sm:$0x1]
    %v1029 = vlaneseq
    %v1030 = vshrl.u32 %v1029, 7
    %v1031 = vsub.s32 0, %v1030
    %v1032 = vrot.slane %v1027, %v1031
    %v1035 = vsel %vm190, %v1022, 0
    %1037 = vmatprep.subr.mxu0 0.0
    %1038 = vmatpush1.msra.mxu0 0.0
    %1039 = vmatprep.subr.mxu0 0.0
    %1040 = vmatpush1.msra.mxu0 0.0
    %1041 = vmatprep.subr.mxu0 0.0
    %1042 = vmatpush1.msra.mxu0 0.0
    %1043 = vmatprep.subr.mxu0 0.0
    %1044 = vmatpush1.msra.mxu0 0.0
    %1045 = vmatprep.subr.mxu0 0.0
    %1046 = vmatpush1.msra.mxu0 0.0
    %1047 = vmatprep.subr.mxu0 0.0
    %1048 = vmatpush1.msra.mxu0 0.0
    %1049 = vmatprep.subr.mxu0 0.0
    %1050 = vmatpush1.msra.mxu0 0.0
    %1051 = vmatprep.subr.mxu0 0.0
    %1052 = vmatpush1.msra.mxu0 0.0
    %1053 = vmatprep.subr.mxu0 0.0
    %1054 = vmatpush1.msra.mxu0 0.0
    %1055 = vmatprep.subr.mxu0 0.0
    %1056 = vmatpush1.msra.mxu0 0.0
    %1057 = vmatprep.subr.mxu0 0.0
    %1058 = vmatpush1.msra.mxu0 0.0
    %1059 = vmatprep.subr.mxu0 0.0
    %1060 = vmatpush1.msra.mxu0 0.0
    %1061 = vmatprep.subr.mxu0 0.0
    %1062 = vmatpush1.msra.mxu0 %v1026
    %1063 = vmatprep.subr.mxu0 0.0
    %1064 = vmatpush1.msra.mxu0 %v1025
    %1065 = vmatprep.subr.mxu0 0.0
    %1066 = vmatpush1.msra.mxu0 %v1024
    %1067 = vmatprep.subr.mxu0 0.0
    %1068 = vmatpush1.msra.mxu0 %v1023
    %1069 = vmatprep.subr.mxu0 0.0
    %1070 = vmatpush2.msra.mxu0 0.0
    %1071 = vmatprep.subr.mxu0 0.0
    %1072 = vmatpush2.msra.mxu0 0.0
    %1073 = vmatprep.subr.mxu0 0.0
    %1074 = vmatpush2.msra.mxu0 0.0
    %1075 = vmatprep.subr.mxu0 0.0
    %1076 = vmatpush2.msra.mxu0 0.0
    %1077 = vmatprep.subr.mxu0 0.0
    %1078 = vmatpush2.msra.mxu0 0.0
    %1079 = vmatprep.subr.mxu0 0.0
    %1080 = vmatpush2.msra.mxu0 0.0
    %1081 = vmatprep.subr.mxu0 0.0
    %1082 = vmatpush2.msra.mxu0 0.0
    %1083 = vmatprep.subr.mxu0 0.0
    %1084 = vmatpush2.msra.mxu0 0.0
    %1085 = vmatprep.subr.mxu0 0.0
    %1086 = vmatpush2.msra.mxu0 0.0
    %1087 = vmatprep.subr.mxu0 0.0
    %1088 = vmatpush2.msra.mxu0 0.0
    %1089 = vmatprep.subr.mxu0 0.0
    %1090 = vmatpush2.msra.mxu0 0.0
    %1091 = vmatprep.subr.mxu0 0.0
    %1092 = vmatpush2.msra.mxu0 0.0
    %1093 = vmatprep.subr.mxu0 0.0
    %1094 = vmatpush2.msra.mxu0 0.0
    %1095 = vmatprep.subr.mxu0 0.0
    %1096 = vmatpush2.msra.mxu0 0.0
    %1097 = vmatprep.subr.mxu0 0.0
    %1098 = vmatpush2.msra.mxu0 0.0
    %1099 = vmatprep.subr.mxu0 0.0
    %1100 = vmatpush2.msra.mxu0 0.0
    %1101 = vmatprep.mubr.f32.mxu0 0.0
    %1102 = vmatmul.mubr.f32.gmra.mxu0 %v1035
    %v1103 = vpop.f32.mrf.mxu0
    %v1104 = vadd.f32 %v1032, %v1103
    %v1105 = vpop.f32.mrf.mxu0
    %1106 = vdwg.mxu0
    %1107 = vst [vmem:[#allocation2] sm:$0xff] %v1104
    %v1108 = vld [vmem:[#allocation9] sm:$0xff]
    %v1109 = vld [vmem:[#allocation9 + $0x8] sm:$0xff]
    %v1110 = vld [vmem:[#allocation9 + $0x10] sm:$0xff]
    %v1111 = vld [vmem:[#allocation9 + $0x18] sm:$0xff]
    %v1112 = vld [vmem:[#allocation2] sm:$0x1]
    %1113 = vmatprep.subr.mxu0 0.0
    %1114 = vmatpush1.msra.mxu0 0.0
    %1115 = vmatprep.subr.mxu0 0.0
    %1116 = vmatpush1.msra.mxu0 0.0
    %1117 = vmatprep.subr.mxu0 0.0
    %1118 = vmatpush1.msra.mxu0 0.0
    %1119 = vmatprep.subr.mxu0 0.0
    %1120 = vmatpush1.msra.mxu0 0.0
    %1121 = vmatprep.subr.mxu0 0.0
    %1122 = vmatpush1.msra.mxu0 0.0
    %1123 = vmatprep.subr.mxu0 0.0
    %1124 = vmatpush1.msra.mxu0 0.0
    %1125 = vmatprep.subr.mxu0 0.0
    %1126 = vmatpush1.msra.mxu0 0.0
    %1127 = vmatprep.subr.mxu0 0.0
    %1128 = vmatpush1.msra.mxu0 0.0
    %1129 = vmatprep.subr.mxu0 0.0
    %1130 = vmatpush1.msra.mxu0 0.0
    %1131 = vmatprep.subr.mxu0 0.0
    %1132 = vmatpush1.msra.mxu0 0.0
    %1133 = vmatprep.subr.mxu0 0.0
    %1134 = vmatpush1.msra.mxu0 0.0
    %1135 = vmatprep.subr.mxu0 0.0
    %1136 = vmatpush1.msra.mxu0 0.0
    %1137 = vmatprep.subr.mxu0 0.0
    %1138 = vmatpush1.msra.mxu0 %v1111
    %1139 = vmatprep.subr.mxu0 0.0
    %1140 = vmatpush1.msra.mxu0 %v1110
    %1141 = vmatprep.subr.mxu0 0.0
    %1142 = vmatpush1.msra.mxu0 %v1109
    %1143 = vmatprep.subr.mxu0 0.0
    %1144 = vmatpush1.msra.mxu0 %v1108
    %1145 = vmatprep.subr.mxu0 0.0
    %1146 = vmatpush2.msra.mxu0 0.0
    %1147 = vmatprep.subr.mxu0 0.0
    %1148 = vmatpush2.msra.mxu0 0.0
    %1149 = vmatprep.subr.mxu0 0.0
    %1150 = vmatpush2.msra.mxu0 0.0
    %1151 = vmatprep.subr.mxu0 0.0
    %1152 = vmatpush2.msra.mxu0 0.0
    %1153 = vmatprep.subr.mxu0 0.0
    %1154 = vmatpush2.msra.mxu0 0.0
    %1155 = vmatprep.subr.mxu0 0.0
    %1156 = vmatpush2.msra.mxu0 0.0
    %1157 = vmatprep.subr.mxu0 0.0
    %1158 = vmatpush2.msra.mxu0 0.0
    %1159 = vmatprep.subr.mxu0 0.0
    %1160 = vmatpush2.msra.mxu0 0.0
    %1161 = vmatprep.subr.mxu0 0.0
    %1162 = vmatpush2.msra.mxu0 0.0
    %1163 = vmatprep.subr.mxu0 0.0
    %1164 = vmatpush2.msra.mxu0 0.0
    %1165 = vmatprep.subr.mxu0 0.0
    %1166 = vmatpush2.msra.mxu0 0.0
    %1167 = vmatprep.subr.mxu0 0.0
    %1168 = vmatpush2.msra.mxu0 0.0
    %1169 = vmatprep.subr.mxu0 0.0
    %1170 = vmatpush2.msra.mxu0 0.0
    %1171 = vmatprep.subr.mxu0 0.0
    %1172 = vmatpush2.msra.mxu0 0.0
    %1173 = vmatprep.subr.mxu0 0.0
    %1174 = vmatpush2.msra.mxu0 0.0
    %1175 = vmatprep.subr.mxu0 0.0
    %1176 = vmatpush2.msra.mxu0 0.0
    %1177 = vmatprep.mubr.f32.mxu0 0.0
    %1178 = vmatmul.mubr.f32.gmra.mxu0 %v192
    %v1179 = vpop.f32.mrf.mxu0
    %v1180 = vadd.f32 %v1112, %v1179
    %v1181 = vpop.f32.mrf.mxu0
    %1182 = vdwg.mxu0
    %v1183 = vtanh.pop %v1180
    %v1184 = vxor.u32 %v1180, 2147483648
    %v1185 = vmul.f32 %v1184, 1.442695
    %v1186 = vpow.pop %v1185
    %v1187 = vadd.f32 %v1186, 1.0
    %v1188 = vrcp.pop %v1187
    %v1189 = vmul.f32 1.0, %v1188
    %v1190 = vsel %vm96, %v1183, %v1189
    %v1191 = vmul.f32 %v1190, 0.0
    %1193 = vrot.lane.b32.xlu0 %v1190, 64
    %v1194 = vpop.permute.xlu0 %1193
    %v1196 = vmul.f32 %v1190, %v1194
    %1198 = vrot.lane.b32.xlu0 %v1196, 32
    %v1199 = vpop.permute.xlu0 %1198
    %v1201 = vadd.f32 %v1191, %v1199
    %v1202 = vtanh.pop %v1201
    %1204 = vrot.lane.b32.xlu0 %v1202, 64
    %v1205 = vpop.permute.xlu0 %1204
    %v1207 = vmul.f32 %v1190, %v1205
    %1209 = vrot.lane.b32.xlu0 %v1207, 32
    %v1210 = vpop.permute.xlu0 %1209
    %1212 = vst.msk [vmem:[#allocation3] sm:$0x1] %vm293, %v1210
    %v1213 = vld [vmem:[#allocation2 + $0x1] sm:$0x1]
    %v1214 = vsel %vm190, %v1210, 0
    %1216 = vmatprep.subr.mxu0 0.0
    %1217 = vmatpush1.msra.mxu0 0.0
    %1218 = vmatprep.subr.mxu0 0.0
    %1219 = vmatpush1.msra.mxu0 0.0
    %1220 = vmatprep.subr.mxu0 0.0
    %1221 = vmatpush1.msra.mxu0 0.0
    %1222 = vmatprep.subr.mxu0 0.0
    %1223 = vmatpush1.msra.mxu0 0.0
    %1224 = vmatprep.subr.mxu0 0.0
    %1225 = vmatpush1.msra.mxu0 0.0
    %1226 = vmatprep.subr.mxu0 0.0
    %1227 = vmatpush1.msra.mxu0 0.0
    %1228 = vmatprep.subr.mxu0 0.0
    %1229 = vmatpush1.msra.mxu0 0.0
    %1230 = vmatprep.subr.mxu0 0.0
    %1231 = vmatpush1.msra.mxu0 0.0
    %1232 = vmatprep.subr.mxu0 0.0
    %1233 = vmatpush1.msra.mxu0 0.0
    %1234 = vmatprep.subr.mxu0 0.0
    %1235 = vmatpush1.msra.mxu0 0.0
    %1236 = vmatprep.subr.mxu0 0.0
    %1237 = vmatpush1.msra.mxu0 0.0
    %1238 = vmatprep.subr.mxu0 0.0
    %1239 = vmatpush1.msra.mxu0 0.0
    %1240 = vmatprep.subr.mxu0 0.0
    %1241 = vmatpush1.msra.mxu0 %v1111
    %1242 = vmatprep.subr.mxu0 0.0
    %1243 = vmatpush1.msra.mxu0 %v1110
    %1244 = vmatprep.subr.mxu0 0.0
    %1245 = vmatpush1.msra.mxu0 %v1109
    %1246 = vmatprep.subr.mxu0 0.0
    %1247 = vmatpush1.msra.mxu0 %v1108
    %1248 = vmatprep.subr.mxu0 0.0
    %1249 = vmatpush2.msra.mxu0 0.0
    %1250 = vmatprep.subr.mxu0 0.0
    %1251 = vmatpush2.msra.mxu0 0.0
    %1252 = vmatprep.subr.mxu0 0.0
    %1253 = vmatpush2.msra.mxu0 0.0
    %1254 = vmatprep.subr.mxu0 0.0
    %1255 = vmatpush2.msra.mxu0 0.0
    %1256 = vmatprep.subr.mxu0 0.0
    %1257 = vmatpush2.msra.mxu0 0.0
    %1258 = vmatprep.subr.mxu0 0.0
    %1259 = vmatpush2.msra.mxu0 0.0
    %1260 = vmatprep.subr.mxu0 0.0
    %1261 = vmatpush2.msra.mxu0 0.0
    %1262 = vmatprep.subr.mxu0 0.0
    %1263 = vmatpush2.msra.mxu0 0.0
    %1264 = vmatprep.subr.mxu0 0.0
    %1265 = vmatpush2.msra.mxu0 0.0
    %1266 = vmatprep.subr.mxu0 0.0
    %1267 = vmatpush2.msra.mxu0 0.0
    %1268 = vmatprep.subr.mxu0 0.0
    %1269 = vmatpush2.msra.mxu0 0.0
    %1270 = vmatprep.subr.mxu0 0.0
    %1271 = vmatpush2.msra.mxu0 0.0
    %1272 = vmatprep.subr.mxu0 0.0
    %1273 = vmatpush2.msra.mxu0 0.0
    %1274 = vmatprep.subr.mxu0 0.0
    %1275 = vmatpush2.msra.mxu0 0.0
    %1276 = vmatprep.subr.mxu0 0.0
    %1277 = vmatpush2.msra.mxu0 0.0
    %1278 = vmatprep.subr.mxu0 0.0
    %1279 = vmatpush2.msra.mxu0 0.0
    %1280 = vmatprep.mubr.f32.mxu0 0.0
    %1281 = vmatmul.mubr.f32.gmra.mxu0 %v1214
    %v1282 = vpop.f32.mrf.mxu0
    %v1283 = vadd.f32 %v1213, %v1282
    %v1284 = vpop.f32.mrf.mxu0
    %1285 = vdwg.mxu0
    %v1286 = vtanh.pop %v1283
    %v1287 = vxor.u32 %v1283, 2147483648
    %v1288 = vmul.f32 %v1287, 1.442695
    %v1289 = vpow.pop %v1288
    %v1290 = vadd.f32 %v1289, 1.0
    %v1291 = vrcp.pop %v1290
    %v1292 = vmul.f32 1.0, %v1291
    %v1293 = vsel %vm96, %v1286, %v1292
    %v1294 = vmul.f32 %v1293, %v1201
    %1296 = vrot.lane.b32.xlu0 %v1293, 64
    %v1297 = vpop.permute.xlu0 %1296
    %v1299 = vmul.f32 %v1293, %v1297
    %1301 = vrot.lane.b32.xlu0 %v1299, 32
    %v1302 = vpop.permute.xlu0 %1301
    %v1304 = vadd.f32 %v1294, %v1302
    %v1305 = vtanh.pop %v1304
    %1307 = vrot.lane.b32.xlu0 %v1305, 64
    %v1308 = vpop.permute.xlu0 %1307
    %v1310 = vmul.f32 %v1293, %v1308
    %1312 = vrot.lane.b32.xlu0 %v1310, 32
    %v1313 = vpop.permute.xlu0 %1312
    %1315 = vst.msk [vmem:[#allocation3 + $0x1] sm:$0x1] %vm293, %v1313
    %v1316 = vld [vmem:[#allocation2 + $0x2] sm:$0x1]
    %v1317 = vsel %vm190, %v1313, 0
    %1319 = vmatprep.subr.mxu0 0.0
    %1320 = vmatpush1.msra.mxu0 0.0
    %1321 = vmatprep.subr.mxu0 0.0
    %1322 = vmatpush1.msra.mxu0 0.0
    %1323 = vmatprep.subr.mxu0 0.0
    %1324 = vmatpush1.msra.mxu0 0.0
    %1325 = vmatprep.subr.mxu0 0.0
    %1326 = vmatpush1.msra.mxu0 0.0
    %1327 = vmatprep.subr.mxu0 0.0
    %1328 = vmatpush1.msra.mxu0 0.0
    %1329 = vmatprep.subr.mxu0 0.0
    %1330 = vmatpush1.msra.mxu0 0.0
    %1331 = vmatprep.subr.mxu0 0.0
    %1332 = vmatpush1.msra.mxu0 0.0
    %1333 = vmatprep.subr.mxu0 0.0
    %1334 = vmatpush1.msra.mxu0 0.0
    %1335 = vmatprep.subr.mxu0 0.0
    %1336 = vmatpush1.msra.mxu0 0.0
    %1337 = vmatprep.subr.mxu0 0.0
    %1338 = vmatpush1.msra.mxu0 0.0
    %1339 = vmatprep.subr.mxu0 0.0
    %1340 = vmatpush1.msra.mxu0 0.0
    %1341 = vmatprep.subr.mxu0 0.0
    %1342 = vmatpush1.msra.mxu0 0.0
    %1343 = vmatprep.subr.mxu0 0.0
    %1344 = vmatpush1.msra.mxu0 %v1111
    %1345 = vmatprep.subr.mxu0 0.0
    %1346 = vmatpush1.msra.mxu0 %v1110
    %1347 = vmatprep.subr.mxu0 0.0
    %1348 = vmatpush1.msra.mxu0 %v1109
    %1349 = vmatprep.subr.mxu0 0.0
    %1350 = vmatpush1.msra.mxu0 %v1108
    %1351 = vmatprep.subr.mxu0 0.0
    %1352 = vmatpush2.msra.mxu0 0.0
    %1353 = vmatprep.subr.mxu0 0.0
    %1354 = vmatpush2.msra.mxu0 0.0
    %1355 = vmatprep.subr.mxu0 0.0
    %1356 = vmatpush2.msra.mxu0 0.0
    %1357 = vmatprep.subr.mxu0 0.0
    %1358 = vmatpush2.msra.mxu0 0.0
    %1359 = vmatprep.subr.mxu0 0.0
    %1360 = vmatpush2.msra.mxu0 0.0
    %1361 = vmatprep.subr.mxu0 0.0
    %1362 = vmatpush2.msra.mxu0 0.0
    %1363 = vmatprep.subr.mxu0 0.0
    %1364 = vmatpush2.msra.mxu0 0.0
    %1365 = vmatprep.subr.mxu0 0.0
    %1366 = vmatpush2.msra.mxu0 0.0
    %1367 = vmatprep.subr.mxu0 0.0
    %1368 = vmatpush2.msra.mxu0 0.0
    %1369 = vmatprep.subr.mxu0 0.0
    %1370 = vmatpush2.msra.mxu0 0.0
    %1371 = vmatprep.subr.mxu0 0.0
    %1372 = vmatpush2.msra.mxu0 0.0
    %1373 = vmatprep.subr.mxu0 0.0
    %1374 = vmatpush2.msra.mxu0 0.0
    %1375 = vmatprep.subr.mxu0 0.0
    %1376 = vmatpush2.msra.mxu0 0.0
    %1377 = vmatprep.subr.mxu0 0.0
    %1378 = vmatpush2.msra.mxu0 0.0
    %1379 = vmatprep.subr.mxu0 0.0
    %1380 = vmatpush2.msra.mxu0 0.0
    %1381 = vmatprep.subr.mxu0 0.0
    %1382 = vmatpush2.msra.mxu0 0.0
    %1383 = vmatprep.mubr.f32.mxu0 0.0
    %1384 = vmatmul.mubr.f32.gmra.mxu0 %v1317
    %v1385 = vpop.f32.mrf.mxu0
    %v1386 = vadd.f32 %v1316, %v1385
    %v1387 = vpop.f32.mrf.mxu0
    %1388 = vdwg.mxu0
    %v1389 = vtanh.pop %v1386
    %v1390 = vxor.u32 %v1386, 2147483648
    %v1391 = vmul.f32 %v1390, 1.442695
    %v1392 = vpow.pop %v1391
    %v1393 = vadd.f32 %v1392, 1.0
    %v1394 = vrcp.pop %v1393
    %v1395 = vmul.f32 1.0, %v1394
    %v1396 = vsel %vm96, %v1389, %v1395
    %v1397 = vmul.f32 %v1396, %v1304
    %1399 = vrot.lane.b32.xlu0 %v1396, 64
    %v1400 = vpop.permute.xlu0 %1399
    %v1402 = vmul.f32 %v1396, %v1400
    %1404 = vrot.lane.b32.xlu0 %v1402, 32
    %v1405 = vpop.permute.xlu0 %1404
    %v1407 = vadd.f32 %v1397, %v1405
    %v1408 = vtanh.pop %v1407
    %1410 = vrot.lane.b32.xlu0 %v1408, 64
    %v1411 = vpop.permute.xlu0 %1410
    %v1413 = vmul.f32 %v1396, %v1411
    %1415 = vrot.lane.b32.xlu0 %v1413, 32
    %v1416 = vpop.permute.xlu0 %1415
    %1418 = vst.msk [vmem:[#allocation3 + $0x2] sm:$0x1] %vm293, %v1416
    %v1419 = vld [vmem:[#allocation2 + $0x3] sm:$0x1]
    %v1420 = vsel %vm190, %v1416, 0
    %1422 = vmatprep.subr.mxu0 0.0
    %1423 = vmatpush1.msra.mxu0 0.0
    %1424 = vmatprep.subr.mxu0 0.0
    %1425 = vmatpush1.msra.mxu0 0.0
    %1426 = vmatprep.subr.mxu0 0.0
    %1427 = vmatpush1.msra.mxu0 0.0
    %1428 = vmatprep.subr.mxu0 0.0
    %1429 = vmatpush1.msra.mxu0 0.0
    %1430 = vmatprep.subr.mxu0 0.0
    %1431 = vmatpush1.msra.mxu0 0.0
    %1432 = vmatprep.subr.mxu0 0.0
    %1433 = vmatpush1.msra.mxu0 0.0
    %1434 = vmatprep.subr.mxu0 0.0
    %1435 = vmatpush1.msra.mxu0 0.0
    %1436 = vmatprep.subr.mxu0 0.0
    %1437 = vmatpush1.msra.mxu0 0.0
    %1438 = vmatprep.subr.mxu0 0.0
    %1439 = vmatpush1.msra.mxu0 0.0
    %1440 = vmatprep.subr.mxu0 0.0
    %1441 = vmatpush1.msra.mxu0 0.0
    %1442 = vmatprep.subr.mxu0 0.0
    %1443 = vmatpush1.msra.mxu0 0.0
    %1444 = vmatprep.subr.mxu0 0.0
    %1445 = vmatpush1.msra.mxu0 0.0
    %1446 = vmatprep.subr.mxu0 0.0
    %1447 = vmatpush1.msra.mxu0 %v1111
    %1448 = vmatprep.subr.mxu0 0.0
    %1449 = vmatpush1.msra.mxu0 %v1110
    %1450 = vmatprep.subr.mxu0 0.0
    %1451 = vmatpush1.msra.mxu0 %v1109
    %1452 = vmatprep.subr.mxu0 0.0
    %1453 = vmatpush1.msra.mxu0 %v1108
    %1454 = vmatprep.subr.mxu0 0.0
    %1455 = vmatpush2.msra.mxu0 0.0
    %1456 = vmatprep.subr.mxu0 0.0
    %1457 = vmatpush2.msra.mxu0 0.0
    %1458 = vmatprep.subr.mxu0 0.0
    %1459 = vmatpush2.msra.mxu0 0.0
    %1460 = vmatprep.subr.mxu0 0.0
    %1461 = vmatpush2.msra.mxu0 0.0
    %1462 = vmatprep.subr.mxu0 0.0
    %1463 = vmatpush2.msra.mxu0 0.0
    %1464 = vmatprep.subr.mxu0 0.0
    %1465 = vmatpush2.msra.mxu0 0.0
    %1466 = vmatprep.subr.mxu0 0.0
    %1467 = vmatpush2.msra.mxu0 0.0
    %1468 = vmatprep.subr.mxu0 0.0
    %1469 = vmatpush2.msra.mxu0 0.0
    %1470 = vmatprep.subr.mxu0 0.0
    %1471 = vmatpush2.msra.mxu0 0.0
    %1472 = vmatprep.subr.mxu0 0.0
    %1473 = vmatpush2.msra.mxu0 0.0
    %1474 = vmatprep.subr.mxu0 0.0
    %1475 = vmatpush2.msra.mxu0 0.0
    %1476 = vmatprep.subr.mxu0 0.0
    %1477 = vmatpush2.msra.mxu0 0.0
    %1478 = vmatprep.subr.mxu0 0.0
    %1479 = vmatpush2.msra.mxu0 0.0
    %1480 = vmatprep.subr.mxu0 0.0
    %1481 = vmatpush2.msra.mxu0 0.0
    %1482 = vmatprep.subr.mxu0 0.0
    %1483 = vmatpush2.msra.mxu0 0.0
    %1484 = vmatprep.subr.mxu0 0.0
    %1485 = vmatpush2.msra.mxu0 0.0
    %1486 = vmatprep.mubr.f32.mxu0 0.0
    %1487 = vmatmul.mubr.f32.gmra.mxu0 %v1420
    %v1488 = vpop.f32.mrf.mxu0
    %v1489 = vadd.f32 %v1419, %v1488
    %v1490 = vpop.f32.mrf.mxu0
    %1491 = vdwg.mxu0
    %v1492 = vtanh.pop %v1489
    %v1493 = vxor.u32 %v1489, 2147483648
    %v1494 = vmul.f32 %v1493, 1.442695
    %v1495 = vpow.pop %v1494
    %v1496 = vadd.f32 %v1495, 1.0
    %v1497 = vrcp.pop %v1496
    %v1498 = vmul.f32 1.0, %v1497
    %v1499 = vsel %vm96, %v1492, %v1498
    %v1500 = vmul.f32 %v1499, %v1407
    %1502 = vrot.lane.b32.xlu0 %v1499, 64
    %v1503 = vpop.permute.xlu0 %1502
    %v1505 = vmul.f32 %v1499, %v1503
    %1507 = vrot.lane.b32.xlu0 %v1505, 32
    %v1508 = vpop.permute.xlu0 %1507
    %v1510 = vadd.f32 %v1500, %v1508
    %v1511 = vtanh.pop %v1510
    %1513 = vrot.lane.b32.xlu0 %v1511, 64
    %v1514 = vpop.permute.xlu0 %1513
    %v1516 = vmul.f32 %v1499, %v1514
    %1518 = vrot.lane.b32.xlu0 %v1516, 32
    %v1519 = vpop.permute.xlu0 %1518
    %1521 = vst.msk [vmem:[#allocation3 + $0x3] sm:$0x1] %vm293, %v1519
    %v1522 = vld [vmem:[#allocation2 + $0x4] sm:$0x1]
    %v1523 = vsel %vm190, %v1519, 0
    %1525 = vmatprep.subr.mxu0 0.0
    %1526 = vmatpush1.msra.mxu0 0.0
    %1527 = vmatprep.subr.mxu0 0.0
    %1528 = vmatpush1.msra.mxu0 0.0
    %1529 = vmatprep.subr.mxu0 0.0
    %1530 = vmatpush1.msra.mxu0 0.0
    %1531 = vmatprep.subr.mxu0 0.0
    %1532 = vmatpush1.msra.mxu0 0.0
    %1533 = vmatprep.subr.mxu0 0.0
    %1534 = vmatpush1.msra.mxu0 0.0
    %1535 = vmatprep.subr.mxu0 0.0
    %1536 = vmatpush1.msra.mxu0 0.0
    %1537 = vmatprep.subr.mxu0 0.0
    %1538 = vmatpush1.msra.mxu0 0.0
    %1539 = vmatprep.subr.mxu0 0.0
    %1540 = vmatpush1.msra.mxu0 0.0
    %1541 = vmatprep.subr.mxu0 0.0
    %1542 = vmatpush1.msra.mxu0 0.0
    %1543 = vmatprep.subr.mxu0 0.0
    %1544 = vmatpush1.msra.mxu0 0.0
    %1545 = vmatprep.subr.mxu0 0.0
    %1546 = vmatpush1.msra.mxu0 0.0
    %1547 = vmatprep.subr.mxu0 0.0
    %1548 = vmatpush1.msra.mxu0 0.0
    %1549 = vmatprep.subr.mxu0 0.0
    %1550 = vmatpush1.msra.mxu0 %v1111
    %1551 = vmatprep.subr.mxu0 0.0
    %1552 = vmatpush1.msra.mxu0 %v1110
    %1553 = vmatprep.subr.mxu0 0.0
    %1554 = vmatpush1.msra.mxu0 %v1109
    %1555 = vmatprep.subr.mxu0 0.0
    %1556 = vmatpush1.msra.mxu0 %v1108
    %1557 = vmatprep.subr.mxu0 0.0
    %1558 = vmatpush2.msra.mxu0 0.0
    %1559 = vmatprep.subr.mxu0 0.0
    %1560 = vmatpush2.msra.mxu0 0.0
    %1561 = vmatprep.subr.mxu0 0.0
    %1562 = vmatpush2.msra.mxu0 0.0
    %1563 = vmatprep.subr.mxu0 0.0
    %1564 = vmatpush2.msra.mxu0 0.0
    %1565 = vmatprep.subr.mxu0 0.0
    %1566 = vmatpush2.msra.mxu0 0.0
    %1567 = vmatprep.subr.mxu0 0.0
    %1568 = vmatpush2.msra.mxu0 0.0
    %1569 = vmatprep.subr.mxu0 0.0
    %1570 = vmatpush2.msra.mxu0 0.0
    %1571 = vmatprep.subr.mxu0 0.0
    %1572 = vmatpush2.msra.mxu0 0.0
    %1573 = vmatprep.subr.mxu0 0.0
    %1574 = vmatpush2.msra.mxu0 0.0
    %1575 = vmatprep.subr.mxu0 0.0
    %1576 = vmatpush2.msra.mxu0 0.0
    %1577 = vmatprep.subr.mxu0 0.0
    %1578 = vmatpush2.msra.mxu0 0.0
    %1579 = vmatprep.subr.mxu0 0.0
    %1580 = vmatpush2.msra.mxu0 0.0
    %1581 = vmatprep.subr.mxu0 0.0
    %1582 = vmatpush2.msra.mxu0 0.0
    %1583 = vmatprep.subr.mxu0 0.0
    %1584 = vmatpush2.msra.mxu0 0.0
    %1585 = vmatprep.subr.mxu0 0.0
    %1586 = vmatpush2.msra.mxu0 0.0
    %1587 = vmatprep.subr.mxu0 0.0
    %1588 = vmatpush2.msra.mxu0 0.0
    %1589 = vmatprep.mubr.f32.mxu0 0.0
    %1590 = vmatmul.mubr.f32.gmra.mxu0 %v1523
    %v1591 = vpop.f32.mrf.mxu0
    %v1592 = vadd.f32 %v1522, %v1591
    %v1593 = vpop.f32.mrf.mxu0
    %1594 = vdwg.mxu0
    %v1595 = vtanh.pop %v1592
    %v1596 = vxor.u32 %v1592, 2147483648
    %v1597 = vmul.f32 %v1596, 1.442695
    %v1598 = vpow.pop %v1597
    %v1599 = vadd.f32 %v1598, 1.0
    %v1600 = vrcp.pop %v1599
    %v1601 = vmul.f32 1.0, %v1600
    %v1602 = vsel %vm96, %v1595, %v1601
    %v1603 = vmul.f32 %v1602, %v1510
    %1605 = vrot.lane.b32.xlu0 %v1602, 64
    %v1606 = vpop.permute.xlu0 %1605
    %v1608 = vmul.f32 %v1602, %v1606
    %1610 = vrot.lane.b32.xlu0 %v1608, 32
    %v1611 = vpop.permute.xlu0 %1610
    %v1613 = vadd.f32 %v1603, %v1611
    %v1614 = vtanh.pop %v1613
    %1616 = vrot.lane.b32.xlu0 %v1614, 64
    %v1617 = vpop.permute.xlu0 %1616
    %v1619 = vmul.f32 %v1602, %v1617
    %1621 = vrot.lane.b32.xlu0 %v1619, 32
    %v1622 = vpop.permute.xlu0 %1621
    %1624 = vst.msk [vmem:[#allocation3 + $0x4] sm:$0x1] %vm293, %v1622
    %v1625 = vld [vmem:[#allocation2 + $0x5] sm:$0x1]
    %v1626 = vsel %vm190, %v1622, 0
    %1628 = vmatprep.subr.mxu0 0.0
    %1629 = vmatpush1.msra.mxu0 0.0
    %1630 = vmatprep.subr.mxu0 0.0
    %1631 = vmatpush1.msra.mxu0 0.0
    %1632 = vmatprep.subr.mxu0 0.0
    %1633 = vmatpush1.msra.mxu0 0.0
    %1634 = vmatprep.subr.mxu0 0.0
    %1635 = vmatpush1.msra.mxu0 0.0
    %1636 = vmatprep.subr.mxu0 0.0
    %1637 = vmatpush1.msra.mxu0 0.0
    %1638 = vmatprep.subr.mxu0 0.0
    %1639 = vmatpush1.msra.mxu0 0.0
    %1640 = vmatprep.subr.mxu0 0.0
    %1641 = vmatpush1.msra.mxu0 0.0
    %1642 = vmatprep.subr.mxu0 0.0
    %1643 = vmatpush1.msra.mxu0 0.0
    %1644 = vmatprep.subr.mxu0 0.0
    %1645 = vmatpush1.msra.mxu0 0.0
    %1646 = vmatprep.subr.mxu0 0.0
    %1647 = vmatpush1.msra.mxu0 0.0
    %1648 = vmatprep.subr.mxu0 0.0
    %1649 = vmatpush1.msra.mxu0 0.0
    %1650 = vmatprep.subr.mxu0 0.0
    %1651 = vmatpush1.msra.mxu0 0.0
    %1652 = vmatprep.subr.mxu0 0.0
    %1653 = vmatpush1.msra.mxu0 %v1111
    %1654 = vmatprep.subr.mxu0 0.0
    %1655 = vmatpush1.msra.mxu0 %v1110
    %1656 = vmatprep.subr.mxu0 0.0
    %1657 = vmatpush1.msra.mxu0 %v1109
    %1658 = vmatprep.subr.mxu0 0.0
    %1659 = vmatpush1.msra.mxu0 %v1108
    %1660 = vmatprep.subr.mxu0 0.0
    %1661 = vmatpush2.msra.mxu0 0.0
    %1662 = vmatprep.subr.mxu0 0.0
    %1663 = vmatpush2.msra.mxu0 0.0
    %1664 = vmatprep.subr.mxu0 0.0
    %1665 = vmatpush2.msra.mxu0 0.0
    %1666 = vmatprep.subr.mxu0 0.0
    %1667 = vmatpush2.msra.mxu0 0.0
    %1668 = vmatprep.subr.mxu0 0.0
    %1669 = vmatpush2.msra.mxu0 0.0
    %1670 = vmatprep.subr.mxu0 0.0
    %1671 = vmatpush2.msra.mxu0 0.0
    %1672 = vmatprep.subr.mxu0 0.0
    %1673 = vmatpush2.msra.mxu0 0.0
    %1674 = vmatprep.subr.mxu0 0.0
    %1675 = vmatpush2.msra.mxu0 0.0
    %1676 = vmatprep.subr.mxu0 0.0
    %1677 = vmatpush2.msra.mxu0 0.0
    %1678 = vmatprep.subr.mxu0 0.0
    %1679 = vmatpush2.msra.mxu0 0.0
    %1680 = vmatprep.subr.mxu0 0.0
    %1681 = vmatpush2.msra.mxu0 0.0
    %1682 = vmatprep.subr.mxu0 0.0
    %1683 = vmatpush2.msra.mxu0 0.0
    %1684 = vmatprep.subr.mxu0 0.0
    %1685 = vmatpush2.msra.mxu0 0.0
    %1686 = vmatprep.subr.mxu0 0.0
    %1687 = vmatpush2.msra.mxu0 0.0
    %1688 = vmatprep.subr.mxu0 0.0
    %1689 = vmatpush2.msra.mxu0 0.0
    %1690 = vmatprep.subr.mxu0 0.0
    %1691 = vmatpush2.msra.mxu0 0.0
    %1692 = vmatprep.mubr.f32.mxu0 0.0
    %1693 = vmatmul.mubr.f32.gmra.mxu0 %v1626
    %v1694 = vpop.f32.mrf.mxu0
    %v1695 = vadd.f32 %v1625, %v1694
    %v1696 = vpop.f32.mrf.mxu0
    %1697 = vdwg.mxu0
    %v1698 = vtanh.pop %v1695
    %v1699 = vxor.u32 %v1695, 2147483648
    %v1700 = vmul.f32 %v1699, 1.442695
    %v1701 = vpow.pop %v1700
    %v1702 = vadd.f32 %v1701, 1.0
    %v1703 = vrcp.pop %v1702
    %v1704 = vmul.f32 1.0, %v1703
    %v1705 = vsel %vm96, %v1698, %v1704
    %v1706 = vmul.f32 %v1705, %v1613
    %1708 = vrot.lane.b32.xlu0 %v1705, 64
    %v1709 = vpop.permute.xlu0 %1708
    %v1711 = vmul.f32 %v1705, %v1709
    %1713 = vrot.lane.b32.xlu0 %v1711, 32
    %v1714 = vpop.permute.xlu0 %1713
    %v1716 = vadd.f32 %v1706, %v1714
    %v1717 = vtanh.pop %v1716
    %1719 = vrot.lane.b32.xlu0 %v1717, 64
    %v1720 = vpop.permute.xlu0 %1719
    %v1722 = vmul.f32 %v1705, %v1720
    %1724 = vrot.lane.b32.xlu0 %v1722, 32
    %v1725 = vpop.permute.xlu0 %1724
    %1727 = vst.msk [vmem:[#allocation3 + $0x5] sm:$0x1] %vm293, %v1725
    %v1728 = vld [vmem:[#allocation2 + $0x6] sm:$0x1]
    %v1729 = vsel %vm190, %v1725, 0
    %1731 = vmatprep.subr.mxu0 0.0
    %1732 = vmatpush1.msra.mxu0 0.0
    %1733 = vmatprep.subr.mxu0 0.0
    %1734 = vmatpush1.msra.mxu0 0.0
    %1735 = vmatprep.subr.mxu0 0.0
    %1736 = vmatpush1.msra.mxu0 0.0
    %1737 = vmatprep.subr.mxu0 0.0
    %1738 = vmatpush1.msra.mxu0 0.0
    %1739 = vmatprep.subr.mxu0 0.0
    %1740 = vmatpush1.msra.mxu0 0.0
    %1741 = vmatprep.subr.mxu0 0.0
    %1742 = vmatpush1.msra.mxu0 0.0
    %1743 = vmatprep.subr.mxu0 0.0
    %1744 = vmatpush1.msra.mxu0 0.0
    %1745 = vmatprep.subr.mxu0 0.0
    %1746 = vmatpush1.msra.mxu0 0.0
    %1747 = vmatprep.subr.mxu0 0.0
    %1748 = vmatpush1.msra.mxu0 0.0
    %1749 = vmatprep.subr.mxu0 0.0
    %1750 = vmatpush1.msra.mxu0 0.0
    %1751 = vmatprep.subr.mxu0 0.0
    %1752 = vmatpush1.msra.mxu0 0.0
    %1753 = vmatprep.subr.mxu0 0.0
    %1754 = vmatpush1.msra.mxu0 0.0
    %1755 = vmatprep.subr.mxu0 0.0
    %1756 = vmatpush1.msra.mxu0 %v1111
    %1757 = vmatprep.subr.mxu0 0.0
    %1758 = vmatpush1.msra.mxu0 %v1110
    %1759 = vmatprep.subr.mxu0 0.0
    %1760 = vmatpush1.msra.mxu0 %v1109
    %1761 = vmatprep.subr.mxu0 0.0
    %1762 = vmatpush1.msra.mxu0 %v1108
    %1763 = vmatprep.subr.mxu0 0.0
    %1764 = vmatpush2.msra.mxu0 0.0
    %1765 = vmatprep.subr.mxu0 0.0
    %1766 = vmatpush2.msra.mxu0 0.0
    %1767 = vmatprep.subr.mxu0 0.0
    %1768 = vmatpush2.msra.mxu0 0.0
    %1769 = vmatprep.subr.mxu0 0.0
    %1770 = vmatpush2.msra.mxu0 0.0
    %1771 = vmatprep.subr.mxu0 0.0
    %1772 = vmatpush2.msra.mxu0 0.0
    %1773 = vmatprep.subr.mxu0 0.0
    %1774 = vmatpush2.msra.mxu0 0.0
    %1775 = vmatprep.subr.mxu0 0.0
    %1776 = vmatpush2.msra.mxu0 0.0
    %1777 = vmatprep.subr.mxu0 0.0
    %1778 = vmatpush2.msra.mxu0 0.0
    %1779 = vmatprep.subr.mxu0 0.0
    %1780 = vmatpush2.msra.mxu0 0.0
    %1781 = vmatprep.subr.mxu0 0.0
    %1782 = vmatpush2.msra.mxu0 0.0
    %1783 = vmatprep.subr.mxu0 0.0
    %1784 = vmatpush2.msra.mxu0 0.0
    %1785 = vmatprep.subr.mxu0 0.0
    %1786 = vmatpush2.msra.mxu0 0.0
    %1787 = vmatprep.subr.mxu0 0.0
    %1788 = vmatpush2.msra.mxu0 0.0
    %1789 = vmatprep.subr.mxu0 0.0
    %1790 = vmatpush2.msra.mxu0 0.0
    %1791 = vmatprep.subr.mxu0 0.0
    %1792 = vmatpush2.msra.mxu0 0.0
    %1793 = vmatprep.subr.mxu0 0.0
    %1794 = vmatpush2.msra.mxu0 0.0
    %1795 = vmatprep.mubr.f32.mxu0 0.0
    %1796 = vmatmul.mubr.f32.gmra.mxu0 %v1729
    %v1797 = vpop.f32.mrf.mxu0
    %v1798 = vadd.f32 %v1728, %v1797
    %v1799 = vpop.f32.mrf.mxu0
    %1800 = vdwg.mxu0
    %v1801 = vtanh.pop %v1798
    %v1802 = vxor.u32 %v1798, 2147483648
    %v1803 = vmul.f32 %v1802, 1.442695
    %v1804 = vpow.pop %v1803
    %v1805 = vadd.f32 %v1804, 1.0
    %v1806 = vrcp.pop %v1805
    %v1807 = vmul.f32 1.0, %v1806
    %v1808 = vsel %vm96, %v1801, %v1807
    %v1809 = vmul.f32 %v1808, %v1716
    %1811 = vrot.lane.b32.xlu0 %v1808, 64
    %v1812 = vpop.permute.xlu0 %1811
    %v1814 = vmul.f32 %v1808, %v1812
    %1816 = vrot.lane.b32.xlu0 %v1814, 32
    %v1817 = vpop.permute.xlu0 %1816
    %v1819 = vadd.f32 %v1809, %v1817
    %v1820 = vtanh.pop %v1819
    %1822 = vrot.lane.b32.xlu0 %v1820, 64
    %v1823 = vpop.permute.xlu0 %1822
    %v1825 = vmul.f32 %v1808, %v1823
    %1827 = vrot.lane.b32.xlu0 %v1825, 32
    %v1828 = vpop.permute.xlu0 %1827
    %1830 = vst.msk [vmem:[#allocation3 + $0x6] sm:$0x1] %vm293, %v1828
    %v1831 = vld [vmem:[#allocation2 + $0x7] sm:$0x1]
    %v1832 = vsel %vm190, %v1828, 0
    %1834 = vmatprep.subr.mxu0 0.0
    %1835 = vmatpush1.msra.mxu0 0.0
    %1836 = vmatprep.subr.mxu0 0.0
    %1837 = vmatpush1.msra.mxu0 0.0
    %1838 = vmatprep.subr.mxu0 0.0
    %1839 = vmatpush1.msra.mxu0 0.0
    %1840 = vmatprep.subr.mxu0 0.0
    %1841 = vmatpush1.msra.mxu0 0.0
    %1842 = vmatprep.subr.mxu0 0.0
    %1843 = vmatpush1.msra.mxu0 0.0
    %1844 = vmatprep.subr.mxu0 0.0
    %1845 = vmatpush1.msra.mxu0 0.0
    %1846 = vmatprep.subr.mxu0 0.0
    %1847 = vmatpush1.msra.mxu0 0.0
    %1848 = vmatprep.subr.mxu0 0.0
    %1849 = vmatpush1.msra.mxu0 0.0
    %1850 = vmatprep.subr.mxu0 0.0
    %1851 = vmatpush1.msra.mxu0 0.0
    %1852 = vmatprep.subr.mxu0 0.0
    %1853 = vmatpush1.msra.mxu0 0.0
    %1854 = vmatprep.subr.mxu0 0.0
    %1855 = vmatpush1.msra.mxu0 0.0
    %1856 = vmatprep.subr.mxu0 0.0
    %1857 = vmatpush1.msra.mxu0 0.0
    %1858 = vmatprep.subr.mxu0 0.0
    %1859 = vmatpush1.msra.mxu0 %v1111
    %1860 = vmatprep.subr.mxu0 0.0
    %1861 = vmatpush1.msra.mxu0 %v1110
    %1862 = vmatprep.subr.mxu0 0.0
    %1863 = vmatpush1.msra.mxu0 %v1109
    %1864 = vmatprep.subr.mxu0 0.0
    %1865 = vmatpush1.msra.mxu0 %v1108
    %1866 = vmatprep.subr.mxu0 0.0
    %1867 = vmatpush2.msra.mxu0 0.0
    %1868 = vmatprep.subr.mxu0 0.0
    %1869 = vmatpush2.msra.mxu0 0.0
    %1870 = vmatprep.subr.mxu0 0.0
    %1871 = vmatpush2.msra.mxu0 0.0
    %1872 = vmatprep.subr.mxu0 0.0
    %1873 = vmatpush2.msra.mxu0 0.0
    %1874 = vmatprep.subr.mxu0 0.0
    %1875 = vmatpush2.msra.mxu0 0.0
    %1876 = vmatprep.subr.mxu0 0.0
    %1877 = vmatpush2.msra.mxu0 0.0
    %1878 = vmatprep.subr.mxu0 0.0
    %1879 = vmatpush2.msra.mxu0 0.0
    %1880 = vmatprep.subr.mxu0 0.0
    %1881 = vmatpush2.msra.mxu0 0.0
    %1882 = vmatprep.subr.mxu0 0.0
    %1883 = vmatpush2.msra.mxu0 0.0
    %1884 = vmatprep.subr.mxu0 0.0
    %1885 = vmatpush2.msra.mxu0 0.0
    %1886 = vmatprep.subr.mxu0 0.0
    %1887 = vmatpush2.msra.mxu0 0.0
    %1888 = vmatprep.subr.mxu0 0.0
    %1889 = vmatpush2.msra.mxu0 0.0
    %1890 = vmatprep.subr.mxu0 0.0
    %1891 = vmatpush2.msra.mxu0 0.0
    %1892 = vmatprep.subr.mxu0 0.0
    %1893 = vmatpush2.msra.mxu0 0.0
    %1894 = vmatprep.subr.mxu0 0.0
    %1895 = vmatpush2.msra.mxu0 0.0
    %1896 = vmatprep.subr.mxu0 0.0
    %1897 = vmatpush2.msra.mxu0 0.0
    %1898 = vmatprep.mubr.f32.mxu0 0.0
    %1899 = vmatmul.mubr.f32.gmra.mxu0 %v1832
    %v1900 = vpop.f32.mrf.mxu0
    %v1901 = vadd.f32 %v1831, %v1900
    %v1902 = vpop.f32.mrf.mxu0
    %1903 = vdwg.mxu0
    %v1904 = vtanh.pop %v1901
    %v1905 = vxor.u32 %v1901, 2147483648
    %v1906 = vmul.f32 %v1905, 1.442695
    %v1907 = vpow.pop %v1906
    %v1908 = vadd.f32 %v1907, 1.0
    %v1909 = vrcp.pop %v1908
    %v1910 = vmul.f32 1.0, %v1909
    %v1911 = vsel %vm96, %v1904, %v1910
    %v1912 = vmul.f32 %v1911, %v1819
    %1914 = vrot.lane.b32.xlu0 %v1911, 64
    %v1915 = vpop.permute.xlu0 %1914
    %v1917 = vmul.f32 %v1911, %v1915
    %1919 = vrot.lane.b32.xlu0 %v1917, 32
    %v1920 = vpop.permute.xlu0 %1919
    %v1922 = vadd.f32 %v1912, %v1920
    %v1923 = vtanh.pop %v1922
    %1925 = vrot.lane.b32.xlu0 %v1923, 64
    %v1926 = vpop.permute.xlu0 %1925
    %v1928 = vmul.f32 %v1911, %v1926
    %1930 = vrot.lane.b32.xlu0 %v1928, 32
    %v1931 = vpop.permute.xlu0 %1930
    %1933 = vst.msk [vmem:[#allocation3 + $0x7] sm:$0x1] %vm293, %v1931
    %1934 = vst.msk [vmem:[#allocation13 + $0x1] sm:$0x1] %vm293, %v1931
    %1936 = vrot.lane.b32.xlu0 %v1922, 96
    %v1937 = vpop.permute.xlu0 %1936
    %1939 = vst.msk [vmem:[#allocation15 + $0x1] sm:$0x1] %vm293, %v1937
    %v1940 = vld [vmem:[#allocation3] sm:$0xff]
    %v1941 = vld [vmem:[#allocation10] sm:$0xff]
    %v1942 = vld [vmem:[#allocation10 + $0x8] sm:$0xff]
    %v1943 = vld [vmem:[#allocation10 + $0x10] sm:$0xff]
    %v1944 = vld [vmem:[#allocation10 + $0x18] sm:$0xff]
    %v1945 = vld [vmem:[%s8] sm:$0x1]
    %v1947 = vlaneseq
    %v1948 = vshrl.u32 %v1947, 7
    %v1949 = vsub.s32 0, %v1948
    %v1950 = vrot.slane %v1945, %v1949
    %v1953 = vsel %vm190, %v1940, 0
    %1955 = vmatprep.subr.mxu0 0.0
    %1956 = vmatpush1.msra.mxu0 0.0
    %1957 = vmatprep.subr.mxu0 0.0
    %1958 = vmatpush1.msra.mxu0 0.0
    %1959 = vmatprep.subr.mxu0 0.0
    %1960 = vmatpush1.msra.mxu0 0.0
    %1961 = vmatprep.subr.mxu0 0.0
    %1962 = vmatpush1.msra.mxu0 0.0
    %1963 = vmatprep.subr.mxu0 0.0
    %1964 = vmatpush1.msra.mxu0 0.0
    %1965 = vmatprep.subr.mxu0 0.0
    %1966 = vmatpush1.msra.mxu0 0.0
    %1967 = vmatprep.subr.mxu0 0.0
    %1968 = vmatpush1.msra.mxu0 0.0
    %1969 = vmatprep.subr.mxu0 0.0
    %1970 = vmatpush1.msra.mxu0 0.0
    %1971 = vmatprep.subr.mxu0 0.0
    %1972 = vmatpush1.msra.mxu0 0.0
    %1973 = vmatprep.subr.mxu0 0.0
    %1974 = vmatpush1.msra.mxu0 0.0
    %1975 = vmatprep.subr.mxu0 0.0
    %1976 = vmatpush1.msra.mxu0 0.0
    %1977 = vmatprep.subr.mxu0 0.0
    %1978 = vmatpush1.msra.mxu0 0.0
    %1979 = vmatprep.subr.mxu0 0.0
    %1980 = vmatpush1.msra.mxu0 %v1944
    %1981 = vmatprep.subr.mxu0 0.0
    %1982 = vmatpush1.msra.mxu0 %v1943
    %1983 = vmatprep.subr.mxu0 0.0
    %1984 = vmatpush1.msra.mxu0 %v1942
    %1985 = vmatprep.subr.mxu0 0.0
    %1986 = vmatpush1.msra.mxu0 %v1941
    %1987 = vmatprep.subr.mxu0 0.0
    %1988 = vmatpush2.msra.mxu0 0.0
    %1989 = vmatprep.subr.mxu0 0.0
    %1990 = vmatpush2.msra.mxu0 0.0
    %1991 = vmatprep.subr.mxu0 0.0
    %1992 = vmatpush2.msra.mxu0 0.0
    %1993 = vmatprep.subr.mxu0 0.0
    %1994 = vmatpush2.msra.mxu0 0.0
    %1995 = vmatprep.subr.mxu0 0.0
    %1996 = vmatpush2.msra.mxu0 0.0
    %1997 = vmatprep.subr.mxu0 0.0
    %1998 = vmatpush2.msra.mxu0 0.0
    %1999 = vmatprep.subr.mxu0 0.0
    %2000 = vmatpush2.msra.mxu0 0.0
    %2001 = vmatprep.subr.mxu0 0.0
    %2002 = vmatpush2.msra.mxu0 0.0
    %2003 = vmatprep.subr.mxu0 0.0
    %2004 = vmatpush2.msra.mxu0 0.0
    %2005 = vmatprep.subr.mxu0 0.0
    %2006 = vmatpush2.msra.mxu0 0.0
    %2007 = vmatprep.subr.mxu0 0.0
    %2008 = vmatpush2.msra.mxu0 0.0
    %2009 = vmatprep.subr.mxu0 0.0
    %2010 = vmatpush2.msra.mxu0 0.0
    %2011 = vmatprep.subr.mxu0 0.0
    %2012 = vmatpush2.msra.mxu0 0.0
    %2013 = vmatprep.subr.mxu0 0.0
    %2014 = vmatpush2.msra.mxu0 0.0
    %2015 = vmatprep.subr.mxu0 0.0
    %2016 = vmatpush2.msra.mxu0 0.0
    %2017 = vmatprep.subr.mxu0 0.0
    %2018 = vmatpush2.msra.mxu0 0.0
    %2019 = vmatprep.mubr.f32.mxu0 0.0
    %2020 = vmatmul.mubr.f32.gmra.mxu0 %v1953
    %v2021 = vpop.f32.mrf.mxu0
    %v2022 = vadd.f32 %v1950, %v2021
    %v2023 = vpop.f32.mrf.mxu0
    %2024 = vdwg.mxu0
    %2025 = vst [vmem:[#allocation12] sm:$0xff] %v2022
    // Predicated region
    $region54: #{tpu_custom_call.1} parent=1 // pred_check
      _
    $region55: #{tpu_custom_call.1} parent=1 // pred_check_branch
      %2027 = sbr.rel (0) target = $region57
    $region56: #{tpu_custom_call.1} parent=1 // pred_region
      %s2029 = ssub.s32 128, 128
      %2030 = vsyncadd [#allocation6], %s2029
      %s2032 = sshll.u32 [#allocation12], 4
      %s2033 = int_to_ptr.vmem [resolvable:$true] %s2032
      %2035 = dma.vmem_to_hbm [thread:$0]  %s2033, 128, %s9, [#allocation6]
    $region57: #{tpu_custom_call.1} parent=1 // pred_fallthru
      _
    // Predicated region
    $region58: #{tpu_custom_call.1} parent=1 // pred_check
      _
    $region59: #{tpu_custom_call.1} parent=1 // pred_check_branch
      %2037 = sbr.rel (0) target = $region61
    $region60: #{tpu_custom_call.1} parent=1 // pred_region
      %s2039 = ssub.s32 32, 32
      %2040 = vsyncadd [#allocation14], %s2039
      %s2042 = sshll.u32 [#allocation13], 4
      %s2043 = int_to_ptr.vmem [resolvable:$true] %s2042
      %2045 = dma.vmem_to_hbm [thread:$0]  %s2043, 32, %s10, [#allocation14]
    $region61: #{tpu_custom_call.1} parent=1 // pred_fallthru
      _
    // Predicated region
    $region62: #{tpu_custom_call.1} parent=1 // pred_check
      _
    $region63: #{tpu_custom_call.1} parent=1 // pred_check_branch
      %2047 = sbr.rel (0) target = $region65
    $region64: #{tpu_custom_call.1} parent=1 // pred_region
      %s2049 = ssub.s32 32, 32
      %2050 = vsyncadd [#allocation14], %s2049
      %s2052 = sshll.u32 [#allocation15], 4
      %s2053 = int_to_ptr.vmem [resolvable:$true] %s2052
      %2055 = dma.vmem_to_hbm [thread:$0]  %s2053, 32, %s11, [#allocation14]
    $region65: #{tpu_custom_call.1} parent=1 // pred_fallthru
      _
    // Predicated region
    $region66: #{tpu_custom_call.1} parent=1 // pred_check
      _
    $region67: #{tpu_custom_call.1} parent=1 // pred_check_branch
      %2057 = sbr.rel (0) target = $region69
    $region68: #{tpu_custom_call.1} parent=1 // pred_region
      %2058 = dma.done [#allocation6], 128
    $region69: #{tpu_custom_call.1} parent=1 // pred_fallthru
      _
    // Predicated region
    $region70: #{tpu_custom_call.1} parent=1 // pred_check
      _
    $region71: #{tpu_custom_call.1} parent=1 // pred_check_branch
      %2060 = sbr.rel (0) target = $region73
    $region72: #{tpu_custom_call.1} parent=1 // pred_region
      %2061 = dma.done [#allocation14], 32
    $region73: #{tpu_custom_call.1} parent=1 // pred_fallthru
      _
    // Predicated region
    $region74: #{tpu_custom_call.1} parent=1 // pred_check
      _
    $region75: #{tpu_custom_call.1} parent=1 // pred_check_branch
      %2063 = sbr.rel (0) target = $region77
    $region76: #{tpu_custom_call.1} parent=1 // pred_region
      %2064 = dma.done [#allocation14], 32
    $region77: #{tpu_custom_call.1} parent=1 // pred_fallthru
      _
    %2065 = vsyncpa [#allocation5], 1
    %2066 = vsyncpa [#allocation8], 1
    %2067 = vsyncpa [#allocation11], 1
    %2068 = vsyncpa [#allocation6], 1
    %2069 = vsyncpa [#allocation14], 1

</llo_original>
